<compile_context>
chip_gen: v7x
topology: tpu7x:2x2x1
jax: 0.10.0
libtpu: 0.0.40
codegen_flags: <defaults>
</compile_context>

<pallas_src>
import functools

import jax
import jax.numpy as jnp
from jax.experimental import pallas as pl
from jax.experimental.pallas import tpu as pltpu

LATENT = 16                     # classifier_latent_maps
TILE_M = 512                    # row-tile cap (multiple of 8)
TILE_N = 1024                   # lane-tile cap (multiple of 128)
VMEM_LIMIT = 32 * 1024 * 1024   # explicit scoped-VMEM budget (safe on v5e/v6e/v7x)


# ---------------------------------------------------------------------------
# Pallas kernel 1: tiled fused matmul + bias (+ ReLU)
# ---------------------------------------------------------------------------
def _mm_bias_kernel(x_ref, w_ref, b_ref, o_ref, *, relu):
    acc = jnp.dot(x_ref[...], w_ref[...], preferred_element_type=jnp.float32)
    acc = acc + b_ref[...].astype(jnp.float32)   # b is (tm,1) or (1,tn); broadcasts either way
    if relu:
        acc = jnp.maximum(acc, 0.0)
    o_ref[...] = acc.astype(o_ref.dtype)


def matmul_bias(x, w, b, *, relu, out_dtype):
    """y = relu?(x @ w + b).  x:(M,K), w:(K,N), b:(M,1) or (1,N).  Tiled over M and N."""
    M, K = x.shape
    K2, N = w.shape
    assert K == K2
    tm = M if M <= TILE_M else TILE_M
    tn = N if N <= TILE_N else TILE_N
    grid = (pl.cdiv(M, tm), pl.cdiv(N, tn))

    if b.shape == (M, 1):
        b_spec = pl.BlockSpec((tm, 1), lambda i, j: (i, 0))
    elif b.shape == (1, N):
        b_spec = pl.BlockSpec((1, tn), lambda i, j: (0, j))
    else:
        raise ValueError(f"bias shape {b.shape} must be ({M},1) or (1,{N})")

    flops = 2 * M * N * K
    bytes_accessed = (x.size * x.dtype.itemsize + w.size * w.dtype.itemsize
                      + b.size * b.dtype.itemsize + M * N * jnp.dtype(out_dtype).itemsize)

    return pl.pallas_call(
        functools.partial(_mm_bias_kernel, relu=relu),
        out_shape=jax.ShapeDtypeStruct((M, N), out_dtype),
        grid=grid,
        in_specs=[
            pl.BlockSpec((tm, K), lambda i, j: (i, 0)),
            pl.BlockSpec((K, tn), lambda i, j: (0, j)),
            b_spec,
        ],
        out_specs=pl.BlockSpec((tm, tn), lambda i, j: (i, j)),
        compiler_params=pltpu.CompilerParams(
            dimension_semantics=("parallel", "parallel"),
            vmem_limit_bytes=VMEM_LIMIT),
        cost_estimate=pl.CostEstimate(flops=flops, transcendentals=0,
                                      bytes_accessed=bytes_accessed),
    )(x, w, b)


# ---------------------------------------------------------------------------
# Pallas kernel 2: fused fc1 + ReLU + fc2 head (batch-tiled)
# ---------------------------------------------------------------------------
def _mlp_head_kernel(x_ref, w1_ref, b1_ref, w2_ref, b2_ref, o_ref):
    h = jnp.dot(x_ref[...], w1_ref[...], preferred_element_type=jnp.float32)
    h = jnp.maximum(h + b1_ref[...], 0.0)                       # f32 epilogue (v5e-safe)
    y = jnp.dot(h.astype(w2_ref.dtype), w2_ref[...], preferred_element_type=jnp.float32)
    o_ref[...] = (y + b2_ref[...]).astype(o_ref.dtype)


def mlp_head(x, w1, b1, w2, b2):
    B, K1 = x.shape
    _, H = w1.shape
    _, O = w2.shape
    tb = B if B <= TILE_M else TILE_M
    grid = (pl.cdiv(B, tb),)

    flops = 2 * B * (K1 * H + H * O)
    bytes_accessed = (x.size * x.dtype.itemsize + w1.size * w1.dtype.itemsize
                      + b1.size * 4 + w2.size * w2.dtype.itemsize + b2.size * 4 + B * O * 4)

    return pl.pallas_call(
        _mlp_head_kernel,
        out_shape=jax.ShapeDtypeStruct((B, O), jnp.float32),
        grid=grid,
        in_specs=[
            pl.BlockSpec((tb, K1), lambda i: (i, 0)),
            pl.BlockSpec((K1, H), lambda i: (0, 0)),
            pl.BlockSpec((1, H), lambda i: (0, 0)),
            pl.BlockSpec((H, O), lambda i: (0, 0)),
            pl.BlockSpec((1, O), lambda i: (0, 0)),
        ],
        out_specs=pl.BlockSpec((tb, O), lambda i: (i, 0)),
        compiler_params=pltpu.CompilerParams(
            dimension_semantics=("parallel",),
            vmem_limit_bytes=VMEM_LIMIT),
        cost_estimate=pl.CostEstimate(flops=flops, transcendentals=0,
                                      bytes_accessed=bytes_accessed),
    )(x, w1, b1, w2, b2)


# ---------------------------------------------------------------------------
# Plain-JAX glue: patch extraction (data rearrangement only) and spectral norm
# ---------------------------------------------------------------------------
def conv1_patches_T(x_bhw):
    """x: (B, 28, 28) -> patches^T (25, B*196); tap order k = dy*5 + dx (5x5, stride 2, pad 2)."""
    B = x_bhw.shape[0]
    xp = jnp.pad(x_bhw, ((0, 0), (2, 2), (2, 2)))
    taps = [xp[:, dy:dy + 28:2, dx:dx + 28:2] for dy in range(5) for dx in range(5)]
    return jnp.stack(taps, axis=0).reshape(25, B * 14 * 14)


def conv2_patches(y1_cbhw):
    """y1: (16, B, 14, 14) -> patches (B*49, 400); column order (dy, dx, cin)."""
    C, B = y1_cbhw.shape[0], y1_cbhw.shape[1]
    yp = jnp.pad(y1_cbhw, ((0, 0), (0, 0), (2, 2), (2, 2)))
    taps = [yp[:, :, dy:dy + 14:2, dx:dx + 14:2] for dy in range(5) for dx in range(5)]
    p = jnp.stack(taps, axis=0)                    # (25, 16, B, 7, 7)
    p = jnp.transpose(p, (2, 3, 4, 0, 1))          # (B, 7, 7, 25, 16)
    return p.reshape(B * 49, 25 * C)


def spectral_normalize(w2d, key, n_iters=50):
    """w / sigma, sigma = top singular value via converged power iteration (random u init)."""
    u = jax.random.normal(key, (w2d.shape[0],), jnp.float32)
    u = u / (jnp.linalg.norm(u) + 1e-12)
    v = jnp.zeros((w2d.shape[1],), jnp.float32)
    for _ in range(n_iters):
        v = w2d.T @ u
        v = v / (jnp.linalg.norm(v) + 1e-12)
        u = w2d @ v
        u = u / (jnp.linalg.norm(u) + 1e-12)
    sigma = u @ (w2d @ v)
    return w2d / sigma


# ---------------------------------------------------------------------------
# Parameters: spectral-norm + all layout folding (transposes / permutations / bf16) at init
# ---------------------------------------------------------------------------
def init_params(key):
    ks = jax.random.split(key, 11)
    conv1_w = 0.1 * jax.random.normal(ks[0], (LATENT, 1, 5, 5), jnp.float32)
    conv1_b = 0.1 * jax.random.normal(ks[1], (LATENT,), jnp.float32)
    conv2_w = 0.1 * jax.random.normal(ks[2], (2 * LATENT, LATENT, 5, 5), jnp.float32)
    conv2_b = 0.1 * jax.random.normal(ks[3], (2 * LATENT,), jnp.float32)
    fc1_w = 0.05 * jax.random.normal(ks[4], (128, 2 * LATENT * 7 * 7), jnp.float32)
    fc1_b = 0.05 * jax.random.normal(ks[5], (128,), jnp.float32)
    fc2_w = 0.05 * jax.random.normal(ks[6], (10, 128), jnp.float32)
    fc2_b = 0.05 * jax.random.normal(ks[7], (10,), jnp.float32)

    # spectral_norm on conv1, conv2, fc1 (eval/frozen-weight semantics: applied once here).
    conv1_w = spectral_normalize(conv1_w.reshape(LATENT, -1), ks[8]).reshape(conv1_w.shape)
    conv2_w = spectral_normalize(conv2_w.reshape(2 * LATENT, -1), ks[9]).reshape(conv2_w.shape)
    fc1_w = spectral_normalize(fc1_w, ks[10])

    params = {
        # conv1, transposed orientation: out(16, B*196) = w1c(16, 25) @ patches(25, B*196)
        "w1c": conv1_w.reshape(LATENT, 25).astype(jnp.bfloat16),
        "b1c": conv1_b.reshape(LATENT, 1),
        # conv2, standard orientation; K rows ordered (dy, dx, cin) to match conv2_patches
        "w2c": jnp.transpose(conv2_w, (2, 3, 1, 0)).reshape(25 * LATENT, 2 * LATENT).astype(jnp.bfloat16),
        "b2c": conv2_b.reshape(1, 2 * LATENT),
        # fc1 pre-transposed and rows permuted (c,h,w) -> (h,w,c) so flatten is a free reshape
        "w1f": jnp.transpose(fc1_w.reshape(128, 2 * LATENT, 7, 7), (2, 3, 1, 0))
                  .reshape(49 * 2 * LATENT, 128).astype(jnp.bfloat16),
        "b1f": fc1_b.reshape(1, 128),
        "w2f": fc2_w.T.astype(jnp.bfloat16),
        "b2f": fc2_b.reshape(1, 10),
    }
    ref = {"conv1_w": conv1_w, "conv1_b": conv1_b, "conv2_w": conv2_w, "conv2_b": conv2_b,
           "fc1_w": fc1_w, "fc1_b": fc1_b, "fc2_w": fc2_w, "fc2_b": fc2_b}
    return params, ref


# ---------------------------------------------------------------------------
# NormShortNet forward (Dropout layers are identity in eval/inference mode)
# ---------------------------------------------------------------------------
def norm_short_net_forward(x_nchw, params):
    B = x_nchw.shape[0]
    x = x_nchw[:, 0].astype(jnp.bfloat16)                               # (B, 28, 28), Cin = 1

    # conv1 + ReLU: lane-dense loads & stores (output is (Cout, B*H*W))
    p1 = conv1_patches_T(x)                                             # (25, B*196) bf16
    y1 = matmul_bias(params["w1c"], p1, params["b1c"],
                     relu=True, out_dtype=jnp.bfloat16)                 # (16, B*196)
    y1 = y1.reshape(LATENT, B, 14, 14)                                  # free reshape

    # conv2 + ReLU
    p2 = conv2_patches(y1)                                              # (B*49, 400) bf16
    y2 = matmul_bias(p2, params["w2c"], params["b2c"],
                     relu=True, out_dtype=jnp.bfloat16)                 # (B*49, 32)

    # Flatten: free reshape (fc1 weight rows were permuted to (h,w,c) order at init)
    xf = y2.reshape(B, 49 * 2 * LATENT)                                 # (B, 1568) bf16

    # fc1 + ReLU + fc2, fused in a single kernel; logits in f32
    return mlp_head(xf, params["w1f"], params["b1f"], params["w2f"], params["b2f"])


# ---------------------------------------------------------------------------
# Pure-JAX/XLA reference for a correctness check
# ---------------------------------------------------------------------------
def reference_forward(x_nchw, ref):
    dn = ("NCHW", "OIHW", "NCHW")
    y = jax.lax.conv_general_dilated(x_nchw, ref["conv1_w"], window_strides=(2, 2),
                                     padding=((2, 2), (2, 2)), dimension_numbers=dn)
    y = jax.nn.relu(y + ref["conv1_b"].reshape(1, -1, 1, 1))
    y = jax.lax.conv_general_dilated(y, ref["conv2_w"], window_strides=(2, 2),
                                     padding=((2, 2), (2, 2)), dimension_numbers=dn)
    y = jax.nn.relu(y + ref["conv2_b"].reshape(1, -1, 1, 1))
    y = y.reshape(y.shape[0], -1)
    y = jax.nn.relu(y @ ref["fc1_w"].T + ref["fc1_b"])
    return y @ ref["fc2_w"].T + ref["fc2_b"]


if __name__ == "__main__":
    key = jax.random.PRNGKey(0)
    k_params, k_x = jax.random.split(key)
    params, ref = init_params(k_params)

    x = jax.random.normal(k_x, (2, 1, 28, 28), jnp.float32)   # batch=2, MNIST-sized input

    out = jax.jit(norm_short_net_forward)(x, params)
    jax.block_until_ready(out)
    assert out.shape == (2, 10) and out.dtype == jnp.float32

    expected = reference_forward(x, ref)
    assert bool(jnp.allclose(out, expected, atol=2e-2, rtol=2e-2)), (out, expected)

    print("KERNEL_OK")
</pallas_src>

<mosaic_0001>
module attributes {stable_mosaic.version = 11 : i64} {
  func.func @_mm_bias_kernel(%arg0: i32, %arg1: i32, %arg2: memref<16x25xbf16, #tpu.memory_space<vmem>>, %arg3: memref<25x392xbf16, #tpu.memory_space<vmem>>, %arg4: memref<16x1xf32, #tpu.memory_space<vmem>>, %arg5: memref<16x392xbf16, #tpu.memory_space<vmem>>) attributes {dimension_semantics = [#tpu.dimension_semantics<parallel>, #tpu.dimension_semantics<parallel>], iteration_bounds = array<i64: 1, 1>, scalar_prefetch = 0 : i64, scratch_operands = 0 : i64, tpu.core_type = #tpu.core_type<tc>, window_params = [{transform_indices = @transform_0, window_bounds = array<i64: 16, 25>}, {transform_indices = @transform_1, window_bounds = array<i64: 25, 392>}, {transform_indices = @transform_2, window_bounds = array<i64: 16, 1>}, {transform_indices = @transform_3, window_bounds = array<i64: 16, 392>}]} {
    %c0 = arith.constant 0 : index
    %c0_0 = arith.constant 0 : index
    %0 = vector.load %arg2[%c0, %c0_0] : memref<16x25xbf16, #tpu.memory_space<vmem>>, vector<16x25xbf16>
    %c0_1 = arith.constant 0 : index
    %c0_2 = arith.constant 0 : index
    %1 = vector.load %arg3[%c0_1, %c0_2] : memref<25x392xbf16, #tpu.memory_space<vmem>>, vector<25x392xbf16>
    %cst = arith.constant dense<0.000000e+00> : vector<16x392xf32>
    %2 = tpu.matmul %0, %1, %cst {dimension_numbers = #tpu.dot_dimension_numbers<[1], [0], [0], [1], [0, 0, 1, 1], [], []>} : vector<16x25xbf16>, vector<25x392xbf16>, vector<16x392xf32> -> vector<16x392xf32>
    %c0_3 = arith.constant 0 : index
    %c0_4 = arith.constant 0 : index
    %3 = vector.load %arg4[%c0_3, %c0_4] : memref<16x1xf32, #tpu.memory_space<vmem>>, vector<16x1xf32>
    %4 = vector.broadcast %3 : vector<16x1xf32> to vector<16x392xf32>
    %5 = arith.addf %2, %4 : vector<16x392xf32>
    %cst_5 = arith.constant 0.000000e+00 : f32
    %6 = vector.broadcast %cst_5 : f32 to vector<16x392xf32>
    %7 = arith.maximumf %5, %6 : vector<16x392xf32>
    %8 = arith.truncf %7 : vector<16x392xf32> to vector<16x392xbf16>
    %c0_6 = arith.constant 0 : index
    %c0_7 = arith.constant 0 : index
    %9 = vector.load %arg5[%c0_6, %c0_7] : memref<16x392xbf16, #tpu.memory_space<vmem>>, vector<16x392xbf16>
    tpu.vector_store %arg5[%c0_6, %c0_7], %8 {strides = array<i32>} : memref<16x392xbf16, #tpu.memory_space<vmem>>, vector<16x392xbf16>,
    return
  }
  func.func @transform_0(%arg0: i32, %arg1: i32) -> (i32, i32) {
    %c0_i32 = arith.constant 0 : i32
    %c0_i32_0 = arith.constant 0 : i32
    return %arg0, %c0_i32 : i32, i32
  }
  func.func @transform_1(%arg0: i32, %arg1: i32) -> (i32, i32) {
    %c0_i32 = arith.constant 0 : i32
    %c0_i32_0 = arith.constant 0 : i32
    return %c0_i32, %arg1 : i32, i32
  }
  func.func @transform_2(%arg0: i32, %arg1: i32) -> (i32, i32) {
    %c0_i32 = arith.constant 0 : i32
    %c0_i32_0 = arith.constant 0 : i32
    return %arg0, %c0_i32 : i32, i32
  }
  func.func @transform_3(%arg0: i32, %arg1: i32) -> (i32, i32) {
    %c0_i32 = arith.constant 0 : i32
    return %arg0, %arg1 : i32, i32
  }
}

module attributes {stable_mosaic.version = 11 : i64} {
  func.func @_mm_bias_kernel(%arg0: i32, %arg1: i32, %arg2: memref<98x400xbf16, #tpu.memory_space<vmem>>, %arg3: memref<400x32xbf16, #tpu.memory_space<vmem>>, %arg4: memref<1x32xf32, #tpu.memory_space<vmem>>, %arg5: memref<98x32xbf16, #tpu.memory_space<vmem>>) attributes {dimension_semantics = [#tpu.dimension_semantics<parallel>, #tpu.dimension_semantics<parallel>], iteration_bounds = array<i64: 1, 1>, scalar_prefetch = 0 : i64, scratch_operands = 0 : i64, tpu.core_type = #tpu.core_type<tc>, window_params = [{transform_indices = @transform_0, window_bounds = array<i64: 98, 400>}, {transform_indices = @transform_1, window_bounds = array<i64: 400, 32>}, {transform_indices = @transform_2, window_bounds = array<i64: 1, 32>}, {transform_indices = @transform_3, window_bounds = array<i64: 98, 32>}]} {
    %c0 = arith.constant 0 : index
    %c0_0 = arith.constant 0 : index
    %0 = vector.load %arg2[%c0, %c0_0] : memref<98x400xbf16, #tpu.memory_space<vmem>>, vector<98x400xbf16>
    %c0_1 = arith.constant 0 : index
    %c0_2 = arith.constant 0 : index
    %1 = vector.load %arg3[%c0_1, %c0_2] : memref<400x32xbf16, #tpu.memory_space<vmem>>, vector<400x32xbf16>
    %cst = arith.constant dense<0.000000e+00> : vector<98x32xf32>
    %2 = tpu.matmul %0, %1, %cst {dimension_numbers = #tpu.dot_dimension_numbers<[1], [0], [0], [1], [0, 0, 1, 1], [], []>} : vector<98x400xbf16>, vector<400x32xbf16>, vector<98x32xf32> -> vector<98x32xf32>
    %c0_3 = arith.constant 0 : index
    %c0_4 = arith.constant 0 : index
    %3 = vector.load %arg4[%c0_3, %c0_4] : memref<1x32xf32, #tpu.memory_space<vmem>>, vector<1x32xf32>
    %4 = vector.broadcast %3 : vector<1x32xf32> to vector<98x32xf32>
    %5 = arith.addf %2, %4 : vector<98x32xf32>
    %cst_5 = arith.constant 0.000000e+00 : f32
    %6 = vector.broadcast %cst_5 : f32 to vector<98x32xf32>
    %7 = arith.maximumf %5, %6 : vector<98x32xf32>
    %8 = arith.truncf %7 : vector<98x32xf32> to vector<98x32xbf16>
    %c0_6 = arith.constant 0 : index
    %c0_7 = arith.constant 0 : index
    %9 = vector.load %arg5[%c0_6, %c0_7] : memref<98x32xbf16, #tpu.memory_space<vmem>>, vector<98x32xbf16>
    tpu.vector_store %arg5[%c0_6, %c0_7], %8 {strides = array<i32>} : memref<98x32xbf16, #tpu.memory_space<vmem>>, vector<98x32xbf16>,
    return
  }
  func.func @transform_0(%arg0: i32, %arg1: i32) -> (i32, i32) {
    %c0_i32 = arith.constant 0 : i32
    %c0_i32_0 = arith.constant 0 : i32
    return %arg0, %c0_i32 : i32, i32
  }
  func.func @transform_1(%arg0: i32, %arg1: i32) -> (i32, i32) {
    %c0_i32 = arith.constant 0 : i32
    %c0_i32_0 = arith.constant 0 : i32
    return %c0_i32, %arg1 : i32, i32
  }
  func.func @transform_2(%arg0: i32, %arg1: i32) -> (i32, i32) {
    %c0_i32 = arith.constant 0 : i32
    %c0_i32_0 = arith.constant 0 : i32
    return %c0_i32, %arg1 : i32, i32
  }
  func.func @transform_3(%arg0: i32, %arg1: i32) -> (i32, i32) {
    %c0_i32 = arith.constant 0 : i32
    return %arg0, %arg1 : i32, i32
  }
}

module attributes {stable_mosaic.version = 11 : i64} {
  func.func @_mlp_head_kernel(%arg0: i32, %arg1: memref<2x1568xbf16, #tpu.memory_space<vmem>>, %arg2: memref<1568x128xbf16, #tpu.memory_space<vmem>>, %arg3: memref<1x128xf32, #tpu.memory_space<vmem>>, %arg4: memref<128x10xbf16, #tpu.memory_space<vmem>>, %arg5: memref<1x10xf32, #tpu.memory_space<vmem>>, %arg6: memref<2x10xf32, #tpu.memory_space<vmem>>) attributes {dimension_semantics = [#tpu.dimension_semantics<parallel>], iteration_bounds = array<i64: 1>, scalar_prefetch = 0 : i64, scratch_operands = 0 : i64, tpu.core_type = #tpu.core_type<tc>, window_params = [{transform_indices = @transform_0, window_bounds = array<i64: 2, 1568>}, {pipeline_mode = #tpu.pipeline_mode<synchronous>, transform_indices = @transform_1, window_bounds = array<i64: 1568, 128>}, {pipeline_mode = #tpu.pipeline_mode<synchronous>, transform_indices = @transform_2, window_bounds = array<i64: 1, 128>}, {pipeline_mode = #tpu.pipeline_mode<synchronous>, transform_indices = @transform_3, window_bounds = array<i64: 128, 10>}, {pipeline_mode = #tpu.pipeline_mode<synchronous>, transform_indices = @transform_4, window_bounds = array<i64: 1, 10>}, {transform_indices = @transform_5, window_bounds = array<i64: 2, 10>}]} {
    %c0 = arith.constant 0 : index
    %c0_0 = arith.constant 0 : index
    %0 = vector.load %arg1[%c0, %c0_0] : memref<2x1568xbf16, #tpu.memory_space<vmem>>, vector<2x1568xbf16>
    %c0_1 = arith.constant 0 : index
    %c0_2 = arith.constant 0 : index
    %1 = vector.load %arg2[%c0_1, %c0_2] : memref<1568x128xbf16, #tpu.memory_space<vmem>>, vector<1568x128xbf16>
    %cst = arith.constant dense<0.000000e+00> : vector<2x128xf32>
    %2 = tpu.matmul %0, %1, %cst {dimension_numbers = #tpu.dot_dimension_numbers<[1], [0], [0], [1], [0, 0, 1, 1], [], []>} : vector<2x1568xbf16>, vector<1568x128xbf16>, vector<2x128xf32> -> vector<2x128xf32>
    %c0_3 = arith.constant 0 : index
    %c0_4 = arith.constant 0 : index
    %3 = vector.load %arg3[%c0_3, %c0_4] : memref<1x128xf32, #tpu.memory_space<vmem>>, vector<1x128xf32>
    %4 = vector.broadcast %3 : vector<1x128xf32> to vector<2x128xf32>
    %5 = arith.addf %2, %4 : vector<2x128xf32>
    %cst_5 = arith.constant 0.000000e+00 : f32
    %6 = vector.broadcast %cst_5 : f32 to vector<2x128xf32>
    %7 = arith.maximumf %5, %6 : vector<2x128xf32>
    %8 = arith.truncf %7 : vector<2x128xf32> to vector<2x128xbf16>
    %c0_6 = arith.constant 0 : index
    %c0_7 = arith.constant 0 : index
    %9 = vector.load %arg4[%c0_6, %c0_7] : memref<128x10xbf16, #tpu.memory_space<vmem>>, vector<128x10xbf16>
    %cst_8 = arith.constant dense<0.000000e+00> : vector<2x10xf32>
    %10 = tpu.matmul %8, %9, %cst_8 {dimension_numbers = #tpu.dot_dimension_numbers<[1], [0], [0], [1], [0, 0, 1, 1], [], []>} : vector<2x128xbf16>, vector<128x10xbf16>, vector<2x10xf32> -> vector<2x10xf32>
    %c0_9 = arith.constant 0 : index
    %c0_10 = arith.constant 0 : index
    %11 = vector.load %arg5[%c0_9, %c0_10] : memref<1x10xf32, #tpu.memory_space<vmem>>, vector<1x10xf32>
    %12 = vector.broadcast %11 : vector<1x10xf32> to vector<2x10xf32>
    %13 = arith.addf %10, %12 : vector<2x10xf32>
    %c0_11 = arith.constant 0 : index
    %c0_12 = arith.constant 0 : index
    %14 = vector.load %arg6[%c0_11, %c0_12] : memref<2x10xf32, #tpu.memory_space<vmem>>, vector<2x10xf32>
    tpu.vector_store %arg6[%c0_11, %c0_12], %13 {strides = array<i32>} : memref<2x10xf32, #tpu.memory_space<vmem>>, vector<2x10xf32>,
    return
  }
  func.func @transform_0(%arg0: i32) -> (i32, i32) {
    %c0_i32 = arith.constant 0 : i32
    %c0_i32_0 = arith.constant 0 : i32
    return %arg0, %c0_i32 : i32, i32
  }
  func.func @transform_1(%arg0: i32) -> (i32, i32) {
    %c0_i32 = arith.constant 0 : i32
    %c0_i32_0 = arith.constant 0 : i32
    %c0_i32_1 = arith.constant 0 : i32
    return %c0_i32, %c0_i32_0 : i32, i32
  }
  func.func @transform_2(%arg0: i32) -> (i32, i32) {
    %c0_i32 = arith.constant 0 : i32
    %c0_i32_0 = arith.constant 0 : i32
    %c0_i32_1 = arith.constant 0 : i32
    return %c0_i32, %c0_i32_0 : i32, i32
  }
  func.func @transform_3(%arg0: i32) -> (i32, i32) {
    %c0_i32 = arith.constant 0 : i32
    %c0_i32_0 = arith.constant 0 : i32
    %c0_i32_1 = arith.constant 0 : i32
    return %c0_i32, %c0_i32_0 : i32, i32
  }
  func.func @transform_4(%arg0: i32) -> (i32, i32) {
    %c0_i32 = arith.constant 0 : i32
    %c0_i32_0 = arith.constant 0 : i32
    %c0_i32_1 = arith.constant 0 : i32
    return %c0_i32, %c0_i32_0 : i32, i32
  }
  func.func @transform_5(%arg0: i32) -> (i32, i32) {
    %c0_i32 = arith.constant 0 : i32
    %c0_i32_0 = arith.constant 0 : i32
    return %arg0, %c0_i32 : i32, i32
  }
}

</mosaic_0001>

<llo_original>
// kernel: norm_short_net_forward.3
$region0: #{norm_short_net_forward.3}
  #allocation0 [shape = 'u32[]', space=smem, size = 0x4, offset = 0x4, fixed_abs, tag = 'smem constant byte address 0x4 - core index']
  #allocation1 [shape = 'u32[144,128]{1,0:T(1,128)}', space=vmem, size = 0x12000, scoped, tag = 'internal scratch']
  %s0 = inlined_call_operand.vmem [shape: bf16[16,25], index: 0, kind: input, shape index: {}]
  %s1 = inlined_call_operand.vmem [shape: bf16[25,392], index: 1, kind: input, shape index: {}]
  %s2 = inlined_call_operand.vmem [shape: f32[16,1], index: 2, kind: input, shape index: {}]
  %s3 = inlined_call_operand.vmem [shape: bf16[16,392], index: 3, kind: output, shape index: {}]
  %s4 = sld [smem:[#allocation0]]
  $region22: #{norm_short_net_forward.3} parent=0
    _
  %s6 = ssub.s32 1, %s4
  %s7 = scalar_select 0, %s6, %s4
  // Predicated region
  $region2: #{norm_short_net_forward.3} parent=0 // pred_check
    _
  $region3: #{norm_short_net_forward.3} parent=0 // pred_check_branch
    %9 = sbr.rel (0) target = $region5
  $region4: #{norm_short_net_forward.3} parent=0 // pred_region
    _
  $region5: #{norm_short_net_forward.3} parent=0 // pred_fallthru
    _
  // Predicated region
  $region6: #{norm_short_net_forward.3} parent=0 // pred_check
    _
  $region7: #{norm_short_net_forward.3} parent=0 // pred_check_branch
    %11 = sbr.rel (0) target = $region9
  $region8: #{norm_short_net_forward.3} parent=0 // pred_region
    _
  $region9: #{norm_short_net_forward.3} parent=0 // pred_fallthru
    _
  // Predicated region
  $region10: #{norm_short_net_forward.3} parent=0 // pred_check
    _
  $region11: #{norm_short_net_forward.3} parent=0 // pred_check_branch
    %13 = sbr.rel (0) target = $region13
  $region12: #{norm_short_net_forward.3} parent=0 // pred_region
    _
  $region13: #{norm_short_net_forward.3} parent=0 // pred_fallthru
    _
  %v15 = vld [vmem:[%s0] sm:$0xf]
  %v16 = vld [vmem:[%s0 + $0x4] sm:$0xf]
  %v17 = vld [vmem:[%s1] sm:$0xff]
  %v18 = vld [vmem:[%s1 + $0x8] sm:$0xff]
  %v19 = vld [vmem:[%s1 + $0x10] sm:$0xff]
  %v20 = vld [vmem:[%s1 + $0x18] sm:$0xff]
  %v21 = vld [vmem:[%s1 + $0x20] sm:$0xff]
  %v22 = vld [vmem:[%s1 + $0x28] sm:$0xff]
  %v23 = vld [vmem:[%s1 + $0x30] sm:$0x11]
  %v24 = vld [vmem:[%s1 + $0x38] sm:$0x11]
  %v25 = vld [vmem:[%s2] sm:$0xff]
  %v26 = vld [vmem:[%s2 + $0x8] sm:$0xff]
  %28 = vset.pattern.permute.xlu0 0
  %29 = vperm.xlu0 %28, %v25
  %v30 = vpop.permute.xlu0 %29
  %33 = vset.pattern.permute.xlu0 0
  %34 = vperm.xlu0 %33, %v26
  %v35 = vpop.permute.xlu0 %34
  %v39 = vunpack.c.l.b16 %v15
  %v40 = vunpack.c.l.b16 %v16
  %v41 = vpack.c.b16 %v40, %v39
  %v50 = vunpack.c.l.b16 %v17
  %v51 = vunpack.c.h.b16 %v17
  %v52 = vunpack.c.l.b16 %v18
  %v53 = vunpack.c.h.b16 %v18
  %v54 = vunpack.c.l.b16 %v19
  %v55 = vunpack.c.h.b16 %v19
  %v56 = vunpack.c.l.b16 %v20
  %v57 = vunpack.c.h.b16 %v20
  %v58 = vunpack.c.l.b16 %v21
  %v59 = vunpack.c.h.b16 %v21
  %v60 = vunpack.c.l.b16 %v22
  %v61 = vunpack.c.h.b16 %v22
  %v62 = vunpack.c.l.b16 %v23
  %v63 = vunpack.c.h.b16 %v23
  %v64 = vunpack.c.l.b16 %v24
  %v65 = vunpack.c.h.b16 %v24
  %v66 = vpack.c.b16 %v54, %v50
  %v67 = vpack.c.b16 %v55, %v51
  %v68 = vpack.c.b16 %v56, %v52
  %v69 = vpack.c.b16 %v57, %v53
  %v70 = vpack.c.b16 %v62, %v58
  %v71 = vpack.c.b16 %v63, %v59
  %v72 = vpack.c.b16 %v64, %v60
  %v73 = vpack.c.b16 %v65, %v61
  %vm78 = vcmask 203776
  %v80 = vsel %vm78, %v41, 0
  %vm82 = vcmask 1043456
  %vm83 = vcmask 1044480
  %v84 = vsel %vm82, 4294967295, 65535
  %v85 = vsel %vm83, %v84, 0
  %v87 = vand.u32 %v70, %v85
  %v90 = vand.u32 %v71, %v85
  %v93 = vand.u32 %v72, %v85
  %v96 = vand.u32 %v73, %v85
  %98 = vmatprep.subr.bf16.mxu0 %v67
  %99 = vmatpush1.bf16.msra.mxu0 %v66
  %100 = vmatprep.subr.bf16.mxu0 %v90
  %101 = vmatpush1.bf16.msra.mxu0 %v87
  %102 = vmatprep.subr.bf16.mxu0 0
  %103 = vmatpush1.bf16.msra.mxu0 0
  %104 = vmatprep.subr.bf16.mxu0 0
  %105 = vmatpush1.bf16.msra.mxu0 0
  %106 = vmatprep.subr.bf16.mxu0 0
  %107 = vmatpush1.bf16.msra.mxu0 0
  %108 = vmatprep.subr.bf16.mxu0 0
  %109 = vmatpush1.bf16.msra.mxu0 0
  %110 = vmatprep.subr.bf16.mxu0 0
  %111 = vmatpush1.bf16.msra.mxu0 0
  %112 = vmatprep.subr.bf16.mxu0 0
  %113 = vmatpush1.bf16.msra.mxu0 0
  %114 = vmatprep.subr.bf16.mxu0 0
  %115 = vmatpush1.bf16.msra.mxu0 0
  %116 = vmatprep.subr.bf16.mxu0 0
  %117 = vmatpush1.bf16.msra.mxu0 0
  %118 = vmatprep.subr.bf16.mxu0 0
  %119 = vmatpush1.bf16.msra.mxu0 0
  %120 = vmatprep.subr.bf16.mxu0 0
  %121 = vmatpush1.bf16.msra.mxu0 0
  %122 = vmatprep.subr.bf16.mxu0 0
  %123 = vmatpush1.bf16.msra.mxu0 0
  %124 = vmatprep.subr.bf16.mxu0 0
  %125 = vmatpush1.bf16.msra.mxu0 0
  %126 = vmatprep.subr.bf16.mxu0 0
  %127 = vmatpush1.bf16.msra.mxu0 0
  %128 = vmatprep.subr.bf16.mxu0 0
  %129 = vmatpush1.bf16.msra.mxu0 0
  %130 = vmatprep.mubr.bf16.mxu0 0
  %131 = vmatmul.mubr.bf16.gmra.mrb[0].mxu0 %v80
  %v132 = vpop.f32.mrb[0].mxu0
  %v133 = vadd.f32 %v30, %v132
  %v134 = vpop.f32.mrb[0].mxu0
  %v135 = vadd.f32 %v30, %v134
  %v136 = vpop.f32.mrb[0].mxu0
  %v137 = vadd.f32 %v35, %v136
  %v138 = vpop.f32.mrb[0].mxu0
  %v139 = vadd.f32 %v35, %v138
  %140 = vdwg.mxu0
  %141 = vmatprep.subr.bf16.mxu0 %v69
  %142 = vmatpush1.bf16.msra.mxu0 %v68
  %143 = vmatprep.subr.bf16.mxu0 %v96
  %144 = vmatpush1.bf16.msra.mxu0 %v93
  %145 = vmatprep.subr.bf16.mxu0 0
  %146 = vmatpush1.bf16.msra.mxu0 0
  %147 = vmatprep.subr.bf16.mxu0 0
  %148 = vmatpush1.bf16.msra.mxu0 0
  %149 = vmatprep.subr.bf16.mxu0 0
  %150 = vmatpush1.bf16.msra.mxu0 0
  %151 = vmatprep.subr.bf16.mxu0 0
  %152 = vmatpush1.bf16.msra.mxu0 0
  %153 = vmatprep.subr.bf16.mxu0 0
  %154 = vmatpush1.bf16.msra.mxu0 0
  %155 = vmatprep.subr.bf16.mxu0 0
  %156 = vmatpush1.bf16.msra.mxu0 0
  %157 = vmatprep.subr.bf16.mxu0 0
  %158 = vmatpush1.bf16.msra.mxu0 0
  %159 = vmatprep.subr.bf16.mxu0 0
  %160 = vmatpush1.bf16.msra.mxu0 0
  %161 = vmatprep.subr.bf16.mxu0 0
  %162 = vmatpush1.bf16.msra.mxu0 0
  %163 = vmatprep.subr.bf16.mxu0 0
  %164 = vmatpush1.bf16.msra.mxu0 0
  %165 = vmatprep.subr.bf16.mxu0 0
  %166 = vmatpush1.bf16.msra.mxu0 0
  %167 = vmatprep.subr.bf16.mxu0 0
  %168 = vmatpush1.bf16.msra.mxu0 0
  %169 = vmatprep.subr.bf16.mxu0 0
  %170 = vmatpush1.bf16.msra.mxu0 0
  %171 = vmatprep.subr.bf16.mxu0 0
  %172 = vmatpush1.bf16.msra.mxu0 0
  %173 = vmatprep.mubr.bf16.mxu0 0
  %174 = vmatmul.mubr.bf16.gmra.mrb[0].mxu0 %v80
  %v175 = vpop.f32.mrb[0].mxu0
  %v176 = vadd.f32 %v30, %v175
  %v177 = vpop.f32.mrb[0].mxu0
  %v178 = vadd.f32 %v30, %v177
  %v179 = vpop.f32.mrb[0].mxu0
  %v180 = vadd.f32 %v35, %v179
  %v181 = vpop.f32.mrb[0].mxu0
  %v182 = vadd.f32 %v35, %v181
  %183 = vdwg.mxu0
  %v184 = vmax.f32 %v133, 0.0
  %v185 = vmax.f32 %v135, 0.0
  %v186 = vmax.f32 %v176, 0.0
  %v187 = vmax.f32 %v178, 0.0
  %v188 = vmax.f32 %v137, 0.0
  %v189 = vmax.f32 %v139, 0.0
  %v190 = vmax.f32 %v180, 0.0
  %v191 = vmax.f32 %v182, 0.0
  %v192 = vpack.c.bf16 %v188, %v184
  %v193 = vpack.c.bf16 %v189, %v185
  %v194 = vpack.c.bf16 %v190, %v186
  %v195 = vpack.c.bf16 %v191, %v187
  %v200 = vunpack.c.l.b16 %v192
  %v201 = vunpack.c.l.b16 %v193
  %v202 = vunpack.c.l.b16 %v194
  %v203 = vunpack.c.l.b16 %v195
  %v204 = vunpack.c.h.b16 %v192
  %v205 = vunpack.c.h.b16 %v193
  %v206 = vunpack.c.h.b16 %v194
  %v207 = vunpack.c.h.b16 %v195
  %v208 = vpack.c.b16 %v201, %v200
  %v209 = vpack.c.b16 %v203, %v202
  %v210 = vpack.c.b16 %v205, %v204
  %v211 = vpack.c.b16 %v207, %v206
  %216 = vst [vmem:[%s3] sm:$0xff] %v208
  %vm217 = vcmask 64516
  %vm218 = vmor %vm217, %vm82
  %219 = vst.msk [vmem:[%s3 + $0x8] sm:$0xff] %vm218, %v209
  %220 = vst [vmem:[%s3 + $0x10] sm:$0xff] %v210
  %221 = vst.msk [vmem:[%s3 + $0x18] sm:$0xff] %vm218, %v211
  // Predicated region
  $region14: #{norm_short_net_forward.3} parent=0 // pred_check
    _
  $region15: #{norm_short_net_forward.3} parent=0 // pred_check_branch
    %223 = sbr.rel (0) target = $region17
  $region16: #{norm_short_net_forward.3} parent=0 // pred_region
    _
  $region17: #{norm_short_net_forward.3} parent=0 // pred_fallthru
    _
  // Predicated region
  $region18: #{norm_short_net_forward.3} parent=0 // pred_check
    _
  $region19: #{norm_short_net_forward.3} parent=0 // pred_check_branch
    %225 = sbr.rel (0) target = $region21
  $region20: #{norm_short_net_forward.3} parent=0 // pred_region
    _
  $region21: #{norm_short_net_forward.3} parent=0 // pred_fallthru
    _

// kernel: norm_short_net_forward.4
$region0: #{norm_short_net_forward.4}
  #allocation0 [shape = 'u32[]', space=smem, size = 0x4, offset = 0x4, fixed_abs, tag = 'smem constant byte address 0x4 - core index']
  #allocation1 [shape = 'u32[144,128]{1,0:T(1,128)}', space=vmem, size = 0x12000, scoped, tag = 'internal scratch']
  %s0 = inlined_call_operand.vmem [shape: bf16[98,400], index: 0, kind: input, shape index: {}]
  %s1 = inlined_call_operand.vmem [shape: bf16[400,32], index: 1, kind: input, shape index: {}]
  %s2 = inlined_call_operand.vmem [shape: f32[1,32], index: 2, kind: input, shape index: {}]
  %s3 = inlined_call_operand.vmem [shape: bf16[98,32], index: 3, kind: output, shape index: {}]
  %s4 = sld [smem:[#allocation0]]
  $region22: #{norm_short_net_forward.4} parent=0
    _
  %s6 = ssub.s32 1, %s4
  %s7 = scalar_select 0, %s6, %s4
  // Predicated region
  $region2: #{norm_short_net_forward.4} parent=0 // pred_check
    _
  $region3: #{norm_short_net_forward.4} parent=0 // pred_check_branch
    %9 = sbr.rel (0) target = $region5
  $region4: #{norm_short_net_forward.4} parent=0 // pred_region
    _
  $region5: #{norm_short_net_forward.4} parent=0 // pred_fallthru
    _
  // Predicated region
  $region6: #{norm_short_net_forward.4} parent=0 // pred_check
    _
  $region7: #{norm_short_net_forward.4} parent=0 // pred_check_branch
    %11 = sbr.rel (0) target = $region9
  $region8: #{norm_short_net_forward.4} parent=0 // pred_region
    _
  $region9: #{norm_short_net_forward.4} parent=0 // pred_fallthru
    _
  // Predicated region
  $region10: #{norm_short_net_forward.4} parent=0 // pred_check
    _
  $region11: #{norm_short_net_forward.4} parent=0 // pred_check_branch
    %13 = sbr.rel (0) target = $region13
  $region12: #{norm_short_net_forward.4} parent=0 // pred_region
    _
  $region13: #{norm_short_net_forward.4} parent=0 // pred_fallthru
    _
  %v15 = vld [vmem:[%s0] sm:$0xff]
  %v16 = vld [vmem:[%s0 + $0x8] sm:$0xff]
  %v17 = vld [vmem:[%s0 + $0x10] sm:$0xff]
  %v18 = vld [vmem:[%s0 + $0x18] sm:$0xff]
  %v19 = vld [vmem:[%s0 + $0x20] sm:$0xff]
  %v20 = vld [vmem:[%s0 + $0x28] sm:$0xff]
  %v21 = vld [vmem:[%s0 + $0x30] sm:$0xff]
  %v22 = vld [vmem:[%s0 + $0x38] sm:$0xff]
  %v23 = vld [vmem:[%s0 + $0x40] sm:$0xff]
  %v24 = vld [vmem:[%s0 + $0x48] sm:$0xff]
  %v25 = vld [vmem:[%s0 + $0x50] sm:$0xff]
  %v26 = vld [vmem:[%s0 + $0x58] sm:$0xff]
  %v27 = vld [vmem:[%s0 + $0x60] sm:$0xff]
  %v28 = vld [vmem:[%s0 + $0x68] sm:$0xff]
  %v29 = vld [vmem:[%s0 + $0x70] sm:$0xff]
  %v30 = vld [vmem:[%s0 + $0x78] sm:$0xff]
  %v31 = vld [vmem:[%s0 + $0x80] sm:$0xff]
  %v32 = vld [vmem:[%s0 + $0x88] sm:$0xff]
  %v33 = vld [vmem:[%s0 + $0x90] sm:$0xff]
  %v34 = vld [vmem:[%s0 + $0x98] sm:$0xff]
  %v35 = vld [vmem:[%s0 + $0xa0] sm:$0xff]
  %v36 = vld [vmem:[%s0 + $0xa8] sm:$0xff]
  %v37 = vld [vmem:[%s0 + $0xb0] sm:$0xff]
  %v38 = vld [vmem:[%s0 + $0xb8] sm:$0xff]
  %v39 = vld [vmem:[%s0 + $0xc0] sm:$0x11]
  %v40 = vld [vmem:[%s0 + $0xc8] sm:$0x11]
  %v41 = vld [vmem:[%s1] sm:$0xf]
  %v42 = vld [vmem:[%s1 + $0x4] sm:$0xf]
  %v43 = vld [vmem:[%s1 + $0x8] sm:$0xf]
  %v44 = vld [vmem:[%s1 + $0xc] sm:$0xf]
  %v45 = vld [vmem:[%s1 + $0x10] sm:$0xf]
  %v46 = vld [vmem:[%s1 + $0x14] sm:$0xf]
  %v47 = vld [vmem:[%s1 + $0x18] sm:$0xf]
  %v48 = vld [vmem:[%s1 + $0x1c] sm:$0xf]
  %v49 = vld [vmem:[%s1 + $0x20] sm:$0xf]
  %v50 = vld [vmem:[%s1 + $0x24] sm:$0xf]
  %v51 = vld [vmem:[%s1 + $0x28] sm:$0xf]
  %v52 = vld [vmem:[%s1 + $0x2c] sm:$0xf]
  %v53 = vld [vmem:[%s1 + $0x30] sm:$0xf]
  %v54 = vld [vmem:[%s1 + $0x34] sm:$0xf]
  %v55 = vld [vmem:[%s1 + $0x38] sm:$0xf]
  %v56 = vld [vmem:[%s1 + $0x3c] sm:$0xf]
  %v57 = vld [vmem:[%s1 + $0x40] sm:$0xf]
  %v58 = vld [vmem:[%s1 + $0x44] sm:$0xf]
  %v59 = vld [vmem:[%s1 + $0x48] sm:$0xf]
  %v60 = vld [vmem:[%s1 + $0x4c] sm:$0xf]
  %v61 = vld [vmem:[%s1 + $0x50] sm:$0xf]
  %v62 = vld [vmem:[%s1 + $0x54] sm:$0xf]
  %v63 = vld [vmem:[%s1 + $0x58] sm:$0xf]
  %v64 = vld [vmem:[%s1 + $0x5c] sm:$0xf]
  %v65 = vld [vmem:[%s1 + $0x60] sm:$0xf]
  %v66 = vld [vmem:[%s1 + $0x64] sm:$0xf]
  %v67 = vld [vmem:[%s1 + $0x68] sm:$0xf]
  %v68 = vld [vmem:[%s1 + $0x6c] sm:$0xf]
  %v69 = vld [vmem:[%s1 + $0x70] sm:$0xf]
  %v70 = vld [vmem:[%s1 + $0x74] sm:$0xf]
  %v71 = vld [vmem:[%s1 + $0x78] sm:$0xf]
  %v72 = vld [vmem:[%s1 + $0x7c] sm:$0xf]
  %v73 = vld [vmem:[%s1 + $0x80] sm:$0xf]
  %v74 = vld [vmem:[%s1 + $0x84] sm:$0xf]
  %v75 = vld [vmem:[%s1 + $0x88] sm:$0xf]
  %v76 = vld [vmem:[%s1 + $0x8c] sm:$0xf]
  %v77 = vld [vmem:[%s1 + $0x90] sm:$0xf]
  %v78 = vld [vmem:[%s1 + $0x94] sm:$0xf]
  %v79 = vld [vmem:[%s1 + $0x98] sm:$0xf]
  %v80 = vld [vmem:[%s1 + $0x9c] sm:$0xf]
  %v81 = vld [vmem:[%s1 + $0xa0] sm:$0xf]
  %v82 = vld [vmem:[%s1 + $0xa4] sm:$0xf]
  %v83 = vld [vmem:[%s1 + $0xa8] sm:$0xf]
  %v84 = vld [vmem:[%s1 + $0xac] sm:$0xf]
  %v85 = vld [vmem:[%s1 + $0xb0] sm:$0xf]
  %v86 = vld [vmem:[%s1 + $0xb4] sm:$0xf]
  %v87 = vld [vmem:[%s1 + $0xb8] sm:$0xf]
  %v88 = vld [vmem:[%s1 + $0xbc] sm:$0xf]
  %v89 = vld [vmem:[%s1 + $0xc0] sm:$0xf]
  %v90 = vld [vmem:[%s1 + $0xc4] sm:$0xf]
  %v91 = vld [vmem:[%s2] sm:$0x1]
  %v93 = vlaneseq
  %v94 = vshrl.u32 %v93, 7
  %v95 = vsub.s32 0, %v94
  %v96 = vrot.slane %v91, %v95
  %v124 = vunpack.c.l.b16 %v15
  %v125 = vunpack.c.h.b16 %v15
  %v126 = vunpack.c.l.b16 %v16
  %v127 = vunpack.c.h.b16 %v16
  %v128 = vunpack.c.l.b16 %v17
  %v129 = vunpack.c.h.b16 %v17
  %v130 = vunpack.c.l.b16 %v18
  %v131 = vunpack.c.h.b16 %v18
  %v132 = vunpack.c.l.b16 %v19
  %v133 = vunpack.c.h.b16 %v19
  %v134 = vunpack.c.l.b16 %v20
  %v135 = vunpack.c.h.b16 %v20
  %v136 = vunpack.c.l.b16 %v21
  %v137 = vunpack.c.h.b16 %v21
  %v138 = vunpack.c.l.b16 %v22
  %v139 = vunpack.c.h.b16 %v22
  %v140 = vunpack.c.l.b16 %v23
  %v141 = vunpack.c.h.b16 %v23
  %v142 = vunpack.c.l.b16 %v24
  %v143 = vunpack.c.h.b16 %v24
  %v144 = vunpack.c.l.b16 %v25
  %v145 = vunpack.c.h.b16 %v25
  %v146 = vunpack.c.l.b16 %v26
  %v147 = vunpack.c.h.b16 %v26
  %v148 = vunpack.c.l.b16 %v27
  %v149 = vunpack.c.h.b16 %v27
  %v150 = vunpack.c.l.b16 %v28
  %v151 = vunpack.c.h.b16 %v28
  %v152 = vunpack.c.l.b16 %v29
  %v153 = vunpack.c.h.b16 %v29
  %v154 = vunpack.c.l.b16 %v30
  %v155 = vunpack.c.h.b16 %v30
  %v156 = vunpack.c.l.b16 %v31
  %v157 = vunpack.c.h.b16 %v31
  %v158 = vunpack.c.l.b16 %v32
  %v159 = vunpack.c.h.b16 %v32
  %v160 = vunpack.c.l.b16 %v33
  %v161 = vunpack.c.h.b16 %v33
  %v162 = vunpack.c.l.b16 %v34
  %v163 = vunpack.c.h.b16 %v34
  %v164 = vunpack.c.l.b16 %v35
  %v165 = vunpack.c.h.b16 %v35
  %v166 = vunpack.c.l.b16 %v36
  %v167 = vunpack.c.h.b16 %v36
  %v168 = vunpack.c.l.b16 %v37
  %v169 = vunpack.c.h.b16 %v37
  %v170 = vunpack.c.l.b16 %v38
  %v171 = vunpack.c.h.b16 %v38
  %v172 = vunpack.c.l.b16 %v39
  %v173 = vunpack.c.h.b16 %v39
  %v174 = vunpack.c.l.b16 %v40
  %v175 = vunpack.c.h.b16 %v40
  %v176 = vpack.c.b16 %v128, %v124
  %v177 = vpack.c.b16 %v129, %v125
  %v178 = vpack.c.b16 %v130, %v126
  %v179 = vpack.c.b16 %v131, %v127
  %v180 = vpack.c.b16 %v136, %v132
  %v181 = vpack.c.b16 %v137, %v133
  %v182 = vpack.c.b16 %v138, %v134
  %v183 = vpack.c.b16 %v139, %v135
  %v184 = vpack.c.b16 %v144, %v140
  %v185 = vpack.c.b16 %v145, %v141
  %v186 = vpack.c.b16 %v146, %v142
  %v187 = vpack.c.b16 %v147, %v143
  %v188 = vpack.c.b16 %v152, %v148
  %v189 = vpack.c.b16 %v153, %v149
  %v190 = vpack.c.b16 %v154, %v150
  %v191 = vpack.c.b16 %v155, %v151
  %v192 = vpack.c.b16 %v160, %v156
  %v193 = vpack.c.b16 %v161, %v157
  %v194 = vpack.c.b16 %v162, %v158
  %v195 = vpack.c.b16 %v163, %v159
  %v196 = vpack.c.b16 %v168, %v164
  %v197 = vpack.c.b16 %v169, %v165
  %v198 = vpack.c.b16 %v170, %v166
  %v199 = vpack.c.b16 %v171, %v167
  %v200 = vpack.c.b16 %v172, %v172
  %v201 = vpack.c.b16 %v173, %v173
  %v202 = vpack.c.b16 %v174, %v174
  %v203 = vpack.c.b16 %v175, %v175
  %v275 = vunpack.c.l.b16 %v41
  %v276 = vunpack.c.l.b16 %v42
  %v277 = vunpack.c.l.b16 %v43
  %v278 = vunpack.c.l.b16 %v44
  %v279 = vunpack.c.l.b16 %v45
  %v280 = vunpack.c.l.b16 %v46
  %v281 = vunpack.c.l.b16 %v47
  %v282 = vunpack.c.l.b16 %v48
  %v283 = vunpack.c.l.b16 %v49
  %v284 = vunpack.c.l.b16 %v50
  %v285 = vunpack.c.l.b16 %v51
  %v286 = vunpack.c.l.b16 %v52
  %v287 = vunpack.c.l.b16 %v53
  %v288 = vunpack.c.l.b16 %v54
  %v289 = vunpack.c.l.b16 %v55
  %v290 = vunpack.c.l.b16 %v56
  %v291 = vunpack.c.l.b16 %v57
  %v292 = vunpack.c.l.b16 %v58
  %v293 = vunpack.c.l.b16 %v59
  %v294 = vunpack.c.l.b16 %v60
  %v295 = vunpack.c.l.b16 %v61
  %v296 = vunpack.c.l.b16 %v62
  %v297 = vunpack.c.l.b16 %v63
  %v298 = vunpack.c.l.b16 %v64
  %v299 = vunpack.c.l.b16 %v65
  %v300 = vunpack.c.l.b16 %v66
  %v301 = vunpack.c.l.b16 %v67
  %v302 = vunpack.c.l.b16 %v68
  %v303 = vunpack.c.l.b16 %v69
  %v304 = vunpack.c.l.b16 %v70
  %v305 = vunpack.c.l.b16 %v71
  %v306 = vunpack.c.l.b16 %v72
  %v307 = vunpack.c.l.b16 %v73
  %v308 = vunpack.c.l.b16 %v74
  %v309 = vunpack.c.l.b16 %v75
  %v310 = vunpack.c.l.b16 %v76
  %v311 = vunpack.c.l.b16 %v77
  %v312 = vunpack.c.l.b16 %v78
  %v313 = vunpack.c.l.b16 %v79
  %v314 = vunpack.c.l.b16 %v80
  %v315 = vunpack.c.l.b16 %v81
  %v316 = vunpack.c.l.b16 %v82
  %v317 = vunpack.c.l.b16 %v83
  %v318 = vunpack.c.l.b16 %v84
  %v319 = vunpack.c.l.b16 %v85
  %v320 = vunpack.c.l.b16 %v86
  %v321 = vunpack.c.l.b16 %v87
  %v322 = vunpack.c.l.b16 %v88
  %v323 = vunpack.c.l.b16 %v89
  %v324 = vunpack.c.l.b16 %v90
  %v325 = vpack.c.b16 %v276, %v275
  %v326 = vpack.c.b16 %v278, %v277
  %v327 = vpack.c.b16 %v280, %v279
  %v328 = vpack.c.b16 %v282, %v281
  %v329 = vpack.c.b16 %v284, %v283
  %v330 = vpack.c.b16 %v286, %v285
  %v331 = vpack.c.b16 %v288, %v287
  %v332 = vpack.c.b16 %v290, %v289
  %v333 = vpack.c.b16 %v292, %v291
  %v334 = vpack.c.b16 %v294, %v293
  %v335 = vpack.c.b16 %v296, %v295
  %v336 = vpack.c.b16 %v298, %v297
  %v337 = vpack.c.b16 %v300, %v299
  %v338 = vpack.c.b16 %v302, %v301
  %v339 = vpack.c.b16 %v304, %v303
  %v340 = vpack.c.b16 %v306, %v305
  %v341 = vpack.c.b16 %v308, %v307
  %v342 = vpack.c.b16 %v310, %v309
  %v343 = vpack.c.b16 %v312, %v311
  %v344 = vpack.c.b16 %v314, %v313
  %v345 = vpack.c.b16 %v316, %v315
  %v346 = vpack.c.b16 %v318, %v317
  %v347 = vpack.c.b16 %v320, %v319
  %v348 = vpack.c.b16 %v322, %v321
  %v349 = vpack.c.b16 %v324, %v323
  %vm375 = vcmask 130048
  %v377 = vsel %vm375, %v179, 0
  %v380 = vsel %vm375, %v183, 0
  %v383 = vsel %vm375, %v187, 0
  %v386 = vsel %vm375, %v191, 0
  %v389 = vsel %vm375, %v195, 0
  %v392 = vsel %vm375, %v199, 0
  %v395 = vsel %vm375, %v203, 0
  %397 = vmatprep.subr.bf16.mxu0 0
  %398 = vmatpush1.bf16.msra.mxu0 %v325
  %399 = vmatprep.subr.bf16.mxu0 0
  %400 = vmatpush1.bf16.msra.mxu0 %v326
  %401 = vmatprep.subr.bf16.mxu0 0
  %402 = vmatpush1.bf16.msra.mxu0 %v327
  %403 = vmatprep.subr.bf16.mxu0 0
  %404 = vmatpush1.bf16.msra.mxu0 %v328
  %405 = vmatprep.subr.bf16.mxu0 0
  %406 = vmatpush1.bf16.msra.mxu0 %v329
  %407 = vmatprep.subr.bf16.mxu0 0
  %408 = vmatpush1.bf16.msra.mxu0 %v330
  %409 = vmatprep.subr.bf16.mxu0 0
  %410 = vmatpush1.bf16.msra.mxu0 %v331
  %411 = vmatprep.subr.bf16.mxu0 0
  %412 = vmatpush1.bf16.msra.mxu0 %v332
  %413 = vmatprep.subr.bf16.mxu0 0
  %414 = vmatpush1.bf16.msra.mxu0 %v333
  %415 = vmatprep.subr.bf16.mxu0 0
  %416 = vmatpush1.bf16.msra.mxu0 %v334
  %417 = vmatprep.subr.bf16.mxu0 0
  %418 = vmatpush1.bf16.msra.mxu0 %v335
  %419 = vmatprep.subr.bf16.mxu0 0
  %420 = vmatpush1.bf16.msra.mxu0 %v336
  %421 = vmatprep.subr.bf16.mxu0 0
  %422 = vmatpush1.bf16.msra.mxu0 %v337
  %423 = vmatprep.subr.bf16.mxu0 0
  %424 = vmatpush1.bf16.msra.mxu0 %v338
  %425 = vmatprep.subr.bf16.mxu0 0
  %426 = vmatpush1.bf16.msra.mxu0 %v339
  %427 = vmatprep.subr.bf16.mxu0 0
  %428 = vmatpush1.bf16.msra.mxu0 %v340
  %429 = vmatprep.mubr.bf16.mxu0 %v177
  %430 = vmatmul.mubr.bf16.gmra.mrb[0].mxu0 %v176
  %v431 = vpop.f32.mrb[0].mxu0
  %v432 = vadd.f32 %v96, %v431
  %v433 = vpop.f32.mrb[0].mxu0
  %v434 = vpop.f32.mrb[0].mxu0
  %v435 = vadd.f32 %v96, %v434
  %v436 = vpop.f32.mrb[0].mxu0
  %437 = vmatprep.mubr.bf16.mxu0 %v181
  %438 = vmatmul.mubr.bf16.gmra.mrb[0].mxu0 %v180
  %v439 = vpop.f32.mrb[0].mxu0
  %v440 = vadd.f32 %v96, %v439
  %v441 = vpop.f32.mrb[0].mxu0
  %v442 = vpop.f32.mrb[0].mxu0
  %v443 = vadd.f32 %v96, %v442
  %v444 = vpop.f32.mrb[0].mxu0
  %445 = vmatprep.mubr.bf16.mxu0 %v185
  %446 = vmatmul.mubr.bf16.gmra.mrb[0].mxu0 %v184
  %v447 = vpop.f32.mrb[0].mxu0
  %v448 = vadd.f32 %v96, %v447
  %v449 = vpop.f32.mrb[0].mxu0
  %v450 = vpop.f32.mrb[0].mxu0
  %v451 = vadd.f32 %v96, %v450
  %v452 = vpop.f32.mrb[0].mxu0
  %453 = vmatprep.mubr.bf16.mxu0 %v189
  %454 = vmatmul.mubr.bf16.gmra.mrb[0].mxu0 %v188
  %v455 = vpop.f32.mrb[0].mxu0
  %v456 = vadd.f32 %v96, %v455
  %v457 = vpop.f32.mrb[0].mxu0
  %v458 = vpop.f32.mrb[0].mxu0
  %v459 = vadd.f32 %v96, %v458
  %v460 = vpop.f32.mrb[0].mxu0
  %461 = vmatprep.mubr.bf16.mxu0 %v193
  %462 = vmatmul.mubr.bf16.gmra.mrb[0].mxu0 %v192
  %v463 = vpop.f32.mrb[0].mxu0
  %v464 = vadd.f32 %v96, %v463
  %v465 = vpop.f32.mrb[0].mxu0
  %v466 = vpop.f32.mrb[0].mxu0
  %v467 = vadd.f32 %v96, %v466
  %v468 = vpop.f32.mrb[0].mxu0
  %469 = vmatprep.mubr.bf16.mxu0 %v197
  %470 = vmatmul.mubr.bf16.gmra.mrb[0].mxu0 %v196
  %v471 = vpop.f32.mrb[0].mxu0
  %v472 = vadd.f32 %v96, %v471
  %v473 = vpop.f32.mrb[0].mxu0
  %v474 = vpop.f32.mrb[0].mxu0
  %v475 = vadd.f32 %v96, %v474
  %v476 = vpop.f32.mrb[0].mxu0
  %477 = vmatprep.mubr.bf16.mxu0 %v201
  %478 = vmatmul.mubr.bf16.gmra.mrb[0].mxu0 %v200
  %v479 = vpop.f32.mrb[0].mxu0
  %v480 = vadd.f32 %v96, %v479
  %v481 = vpop.f32.mrb[0].mxu0
  %v482 = vpop.f32.mrb[0].mxu0
  %v483 = vpop.f32.mrb[0].mxu0
  %484 = vdwg.mxu0
  %485 = vmatprep.subr.bf16.mxu0 0
  %486 = vmatpush1.bf16.msra.mxu0 %v341
  %487 = vmatprep.subr.bf16.mxu0 0
  %488 = vmatpush1.bf16.msra.mxu0 %v342
  %489 = vmatprep.subr.bf16.mxu0 0
  %490 = vmatpush1.bf16.msra.mxu0 %v343
  %491 = vmatprep.subr.bf16.mxu0 0
  %492 = vmatpush1.bf16.msra.mxu0 %v344
  %493 = vmatprep.subr.bf16.mxu0 0
  %494 = vmatpush1.bf16.msra.mxu0 %v345
  %495 = vmatprep.subr.bf16.mxu0 0
  %496 = vmatpush1.bf16.msra.mxu0 %v346
  %497 = vmatprep.subr.bf16.mxu0 0
  %498 = vmatpush1.bf16.msra.mxu0 %v347
  %499 = vmatprep.subr.bf16.mxu0 0
  %500 = vmatpush1.bf16.msra.mxu0 %v348
  %501 = vmatprep.subr.bf16.mxu0 0
  %502 = vmatpush1.bf16.msra.mxu0 %v349
  %503 = vmatprep.subr.bf16.mxu0 0
  %504 = vmatpush1.bf16.msra.mxu0 0
  %505 = vmatprep.subr.bf16.mxu0 0
  %506 = vmatpush1.bf16.msra.mxu0 0
  %507 = vmatprep.subr.bf16.mxu0 0
  %508 = vmatpush1.bf16.msra.mxu0 0
  %509 = vmatprep.subr.bf16.mxu0 0
  %510 = vmatpush1.bf16.msra.mxu0 0
  %511 = vmatprep.subr.bf16.mxu0 0
  %512 = vmatpush1.bf16.msra.mxu0 0
  %513 = vmatprep.subr.bf16.mxu0 0
  %514 = vmatpush1.bf16.msra.mxu0 0
  %515 = vmatprep.subr.bf16.mxu0 0
  %516 = vmatpush1.bf16.msra.mxu0 0
  %517 = vmatprep.mubr.bf16.mxu0 %v377
  %518 = vmatmul.mubr.bf16.gmra.mrb[0].mxu0 %v178
  %v519 = vpop.f32.mrb[0].mxu0
  %v520 = vadd.f32 %v432, %v519
  %v521 = vpop.f32.mrb[0].mxu0
  %v522 = vpop.f32.mrb[0].mxu0
  %v523 = vadd.f32 %v435, %v522
  %v524 = vpop.f32.mrb[0].mxu0
  %525 = vmatprep.mubr.bf16.mxu0 %v380
  %526 = vmatmul.mubr.bf16.gmra.mrb[0].mxu0 %v182
  %v527 = vpop.f32.mrb[0].mxu0
  %v528 = vadd.f32 %v440, %v527
  %v529 = vpop.f32.mrb[0].mxu0
  %v530 = vpop.f32.mrb[0].mxu0
  %v531 = vadd.f32 %v443, %v530
  %v532 = vpop.f32.mrb[0].mxu0
  %533 = vmatprep.mubr.bf16.mxu0 %v383
  %534 = vmatmul.mubr.bf16.gmra.mrb[0].mxu0 %v186
  %v535 = vpop.f32.mrb[0].mxu0
  %v536 = vadd.f32 %v448, %v535
  %v537 = vpop.f32.mrb[0].mxu0
  %v538 = vpop.f32.mrb[0].mxu0
  %v539 = vadd.f32 %v451, %v538
  %v540 = vpop.f32.mrb[0].mxu0
  %541 = vmatprep.mubr.bf16.mxu0 %v386
  %542 = vmatmul.mubr.bf16.gmra.mrb[0].mxu0 %v190
  %v543 = vpop.f32.mrb[0].mxu0
  %v544 = vadd.f32 %v456, %v543
  %v545 = vpop.f32.mrb[0].mxu0
  %v546 = vpop.f32.mrb[0].mxu0
  %v547 = vadd.f32 %v459, %v546
  %v548 = vpop.f32.mrb[0].mxu0
  %549 = vmatprep.mubr.bf16.mxu0 %v389
  %550 = vmatmul.mubr.bf16.gmra.mrb[0].mxu0 %v194
  %v551 = vpop.f32.mrb[0].mxu0
  %v552 = vadd.f32 %v464, %v551
  %v553 = vpop.f32.mrb[0].mxu0
  %v554 = vpop.f32.mrb[0].mxu0
  %v555 = vadd.f32 %v467, %v554
  %v556 = vpop.f32.mrb[0].mxu0
  %557 = vmatprep.mubr.bf16.mxu0 %v392
  %558 = vmatmul.mubr.bf16.gmra.mrb[0].mxu0 %v198
  %v559 = vpop.f32.mrb[0].mxu0
  %v560 = vadd.f32 %v472, %v559
  %v561 = vpop.f32.mrb[0].mxu0
  %v562 = vpop.f32.mrb[0].mxu0
  %v563 = vadd.f32 %v475, %v562
  %v564 = vpop.f32.mrb[0].mxu0
  %565 = vmatprep.mubr.bf16.mxu0 %v395
  %566 = vmatmul.mubr.bf16.gmra.mrb[0].mxu0 %v202
  %v567 = vpop.f32.mrb[0].mxu0
  %v568 = vadd.f32 %v480, %v567
  %v569 = vpop.f32.mrb[0].mxu0
  %v570 = vpop.f32.mrb[0].mxu0
  %v571 = vpop.f32.mrb[0].mxu0
  %572 = vdwg.mxu0
  %v573 = vmax.f32 %v520, 0.0
  %v574 = vmax.f32 %v523, 0.0
  %v575 = vmax.f32 %v528, 0.0
  %v576 = vmax.f32 %v531, 0.0
  %v577 = vmax.f32 %v536, 0.0
  %v578 = vmax.f32 %v539, 0.0
  %v579 = vmax.f32 %v544, 0.0
  %v580 = vmax.f32 %v547, 0.0
  %v581 = vmax.f32 %v552, 0.0
  %v582 = vmax.f32 %v555, 0.0
  %v583 = vmax.f32 %v560, 0.0
  %v584 = vmax.f32 %v563, 0.0
  %v585 = vmax.f32 %v568, 0.0
  %v586 = vpack.c.bf16 %v574, %v573
  %v587 = vpack.c.bf16 %v576, %v575
  %v588 = vpack.c.bf16 %v578, %v577
  %v589 = vpack.c.bf16 %v580, %v579
  %v590 = vpack.c.bf16 %v582, %v581
  %v591 = vpack.c.bf16 %v584, %v583
  %v592 = vpack.c.bf16 %v585, %v585
  %v600 = vunpack.c.l.b16 %v586
  %v601 = vunpack.c.h.b16 %v586
  %v602 = vunpack.c.l.b16 %v587
  %v603 = vunpack.c.h.b16 %v587
  %v604 = vunpack.c.l.b16 %v588
  %v605 = vunpack.c.h.b16 %v588
  %v606 = vunpack.c.l.b16 %v589
  %v607 = vunpack.c.h.b16 %v589
  %v608 = vunpack.c.l.b16 %v590
  %v609 = vunpack.c.h.b16 %v590
  %v610 = vunpack.c.l.b16 %v591
  %v611 = vunpack.c.h.b16 %v591
  %v612 = vunpack.c.l.b16 %v592
  %v613 = vpack.c.b16 %v600, %v600
  %v614 = vpack.c.b16 %v601, %v601
  %v615 = vpack.c.b16 %v602, %v602
  %v616 = vpack.c.b16 %v603, %v603
  %v617 = vpack.c.b16 %v604, %v604
  %v618 = vpack.c.b16 %v605, %v605
  %v619 = vpack.c.b16 %v606, %v606
  %v620 = vpack.c.b16 %v607, %v607
  %v621 = vpack.c.b16 %v608, %v608
  %v622 = vpack.c.b16 %v609, %v609
  %v623 = vpack.c.b16 %v610, %v610
  %v624 = vpack.c.b16 %v611, %v611
  %v625 = vpack.c.b16 %v612, %v612
  %vm639 = vcmask 257024
  %640 = vst.msk [vmem:[%s3] sm:$0xf] %vm639, %v613
  %641 = vst.msk [vmem:[%s3 + $0x4] sm:$0xf] %vm639, %v614
  %642 = vst.msk [vmem:[%s3 + $0x8] sm:$0xf] %vm639, %v615
  %643 = vst.msk [vmem:[%s3 + $0xc] sm:$0xf] %vm639, %v616
  %644 = vst.msk [vmem:[%s3 + $0x10] sm:$0xf] %vm639, %v617
  %645 = vst.msk [vmem:[%s3 + $0x14] sm:$0xf] %vm639, %v618
  %646 = vst.msk [vmem:[%s3 + $0x18] sm:$0xf] %vm639, %v619
  %647 = vst.msk [vmem:[%s3 + $0x1c] sm:$0xf] %vm639, %v620
  %648 = vst.msk [vmem:[%s3 + $0x20] sm:$0xf] %vm639, %v621
  %649 = vst.msk [vmem:[%s3 + $0x24] sm:$0xf] %vm639, %v622
  %650 = vst.msk [vmem:[%s3 + $0x28] sm:$0xf] %vm639, %v623
  %651 = vst.msk [vmem:[%s3 + $0x2c] sm:$0xf] %vm639, %v624
  %vm652 = vcmask 253952
  %653 = vst.msk [vmem:[%s3 + $0x30] sm:$0x1] %vm652, %v625
  // Predicated region
  $region14: #{norm_short_net_forward.4} parent=0 // pred_check
    _
  $region15: #{norm_short_net_forward.4} parent=0 // pred_check_branch
    %655 = sbr.rel (0) target = $region17
  $region16: #{norm_short_net_forward.4} parent=0 // pred_region
    _
  $region17: #{norm_short_net_forward.4} parent=0 // pred_fallthru
    _
  // Predicated region
  $region18: #{norm_short_net_forward.4} parent=0 // pred_check
    _
  $region19: #{norm_short_net_forward.4} parent=0 // pred_check_branch
    %657 = sbr.rel (0) target = $region21
  $region20: #{norm_short_net_forward.4} parent=0 // pred_region
    _
  $region21: #{norm_short_net_forward.4} parent=0 // pred_fallthru
    _

// kernel: norm_short_net_forward.5
$region0: #{norm_short_net_forward.5}
  #allocation0 [shape = 'u32[]', space=smem, size = 0x4, offset = 0x4, fixed_abs, tag = 'smem constant byte address 0x4 - core index']
  #allocation1 [shape = 'u32[144,128]{1,0:T(1,128)}', space=vmem, size = 0x12000, scoped, tag = 'internal scratch']
  %s0 = inlined_call_operand.vmem [shape: bf16[2,1568], index: 0, kind: input, shape index: {}]
  %s1 = inlined_call_operand.vmem [shape: bf16[1568,128], index: 1, kind: input, shape index: {}]
  %s2 = inlined_call_operand.vmem [shape: f32[1,128], index: 2, kind: input, shape index: {}]
  %s3 = inlined_call_operand.vmem [shape: bf16[128,10], index: 3, kind: input, shape index: {}]
  %s4 = inlined_call_operand.vmem [shape: f32[1,10], index: 4, kind: input, shape index: {}]
  %s5 = inlined_call_operand.hbm [shape: f32[2,10], index: 5, kind: output, shape index: {}]
  %s6 = sld [smem:[#allocation0]]
  $region30: #{norm_short_net_forward.5} parent=0
    _
  %s8 = ssub.s32 1, %s6
  %s9 = scalar_select 0, %s8, %s6
  $region1: #{norm_short_net_forward.5} parent=0
    #allocation2 [shape = 'u8[1024]{0}', space=vmem, size = 0x400, scoped, tag = 'output window, operand 0, single buffered']
    #allocation3 [shape = 's32[1]{0}', space=sflag, size = 0x4, scoped, tag = 'scoped memory for norm_short_net_forward.5']
    %10 = vsyncpa [#allocation3], 0
    // Predicated region
    $region2: #{norm_short_net_forward.5} parent=1 // pred_check
      _
    $region3: #{norm_short_net_forward.5} parent=1 // pred_check_branch
      %12 = sbr.rel (0) target = $region5
    $region4: #{norm_short_net_forward.5} parent=1 // pred_region
      _
    $region5: #{norm_short_net_forward.5} parent=1 // pred_fallthru
      _
    // Predicated region
    $region6: #{norm_short_net_forward.5} parent=1 // pred_check
      _
    $region7: #{norm_short_net_forward.5} parent=1 // pred_check_branch
      %14 = sbr.rel (0) target = $region9
    $region8: #{norm_short_net_forward.5} parent=1 // pred_region
      _
    $region9: #{norm_short_net_forward.5} parent=1 // pred_fallthru
      _
    // Predicated region
    $region10: #{norm_short_net_forward.5} parent=1 // pred_check
      _
    $region11: #{norm_short_net_forward.5} parent=1 // pred_check_branch
      %16 = sbr.rel (0) target = $region13
    $region12: #{norm_short_net_forward.5} parent=1 // pred_region
      _
    $region13: #{norm_short_net_forward.5} parent=1 // pred_fallthru
      _
    // Predicated region
    $region14: #{norm_short_net_forward.5} parent=1 // pred_check
      _
    $region15: #{norm_short_net_forward.5} parent=1 // pred_check_branch
      %18 = sbr.rel (0) target = $region17
    $region16: #{norm_short_net_forward.5} parent=1 // pred_region
      _
    $region17: #{norm_short_net_forward.5} parent=1 // pred_fallthru
      _
    // Predicated region
    $region18: #{norm_short_net_forward.5} parent=1 // pred_check
      _
    $region19: #{norm_short_net_forward.5} parent=1 // pred_check_branch
      %20 = sbr.rel (0) target = $region21
    $region20: #{norm_short_net_forward.5} parent=1 // pred_region
      _
    $region21: #{norm_short_net_forward.5} parent=1 // pred_fallthru
      _
    %v22 = vld [vmem:[%s0] sm:$0xff]
    %v23 = vld [vmem:[%s0 + $0x8] sm:$0x1f]
    %v24 = vld [vmem:[%s1] sm:$0xf]
    %v25 = vld [vmem:[%s1 + $0x4] sm:$0xf]
    %v26 = vld [vmem:[%s1 + $0x8] sm:$0xf]
    %v27 = vld [vmem:[%s1 + $0xc] sm:$0xf]
    %v28 = vld [vmem:[%s1 + $0x10] sm:$0xf]
    %v29 = vld [vmem:[%s1 + $0x14] sm:$0xf]
    %v30 = vld [vmem:[%s1 + $0x18] sm:$0xf]
    %v31 = vld [vmem:[%s1 + $0x1c] sm:$0xf]
    %v32 = vld [vmem:[%s1 + $0x20] sm:$0xf]
    %v33 = vld [vmem:[%s1 + $0x24] sm:$0xf]
    %v34 = vld [vmem:[%s1 + $0x28] sm:$0xf]
    %v35 = vld [vmem:[%s1 + $0x2c] sm:$0xf]
    %v36 = vld [vmem:[%s1 + $0x30] sm:$0xf]
    %v37 = vld [vmem:[%s1 + $0x34] sm:$0xf]
    %v38 = vld [vmem:[%s1 + $0x38] sm:$0xf]
    %v39 = vld [vmem:[%s1 + $0x3c] sm:$0xf]
    %v40 = vld [vmem:[%s1 + $0x40] sm:$0xf]
    %v41 = vld [vmem:[%s1 + $0x44] sm:$0xf]
    %v42 = vld [vmem:[%s1 + $0x48] sm:$0xf]
    %v43 = vld [vmem:[%s1 + $0x4c] sm:$0xf]
    %v44 = vld [vmem:[%s1 + $0x50] sm:$0xf]
    %v45 = vld [vmem:[%s1 + $0x54] sm:$0xf]
    %v46 = vld [vmem:[%s1 + $0x58] sm:$0xf]
    %v47 = vld [vmem:[%s1 + $0x5c] sm:$0xf]
    %v48 = vld [vmem:[%s1 + $0x60] sm:$0xf]
    %v49 = vld [vmem:[%s1 + $0x64] sm:$0xf]
    %v50 = vld [vmem:[%s1 + $0x68] sm:$0xf]
    %v51 = vld [vmem:[%s1 + $0x6c] sm:$0xf]
    %v52 = vld [vmem:[%s1 + $0x70] sm:$0xf]
    %v53 = vld [vmem:[%s1 + $0x74] sm:$0xf]
    %v54 = vld [vmem:[%s1 + $0x78] sm:$0xf]
    %v55 = vld [vmem:[%s1 + $0x7c] sm:$0xf]
    %v56 = vld [vmem:[%s1 + $0x80] sm:$0xf]
    %v57 = vld [vmem:[%s1 + $0x84] sm:$0xf]
    %v58 = vld [vmem:[%s1 + $0x88] sm:$0xf]
    %v59 = vld [vmem:[%s1 + $0x8c] sm:$0xf]
    %v60 = vld [vmem:[%s1 + $0x90] sm:$0xf]
    %v61 = vld [vmem:[%s1 + $0x94] sm:$0xf]
    %v62 = vld [vmem:[%s1 + $0x98] sm:$0xf]
    %v63 = vld [vmem:[%s1 + $0x9c] sm:$0xf]
    %v64 = vld [vmem:[%s1 + $0xa0] sm:$0xf]
    %v65 = vld [vmem:[%s1 + $0xa4] sm:$0xf]
    %v66 = vld [vmem:[%s1 + $0xa8] sm:$0xf]
    %v67 = vld [vmem:[%s1 + $0xac] sm:$0xf]
    %v68 = vld [vmem:[%s1 + $0xb0] sm:$0xf]
    %v69 = vld [vmem:[%s1 + $0xb4] sm:$0xf]
    %v70 = vld [vmem:[%s1 + $0xb8] sm:$0xf]
    %v71 = vld [vmem:[%s1 + $0xbc] sm:$0xf]
    %v72 = vld [vmem:[%s1 + $0xc0] sm:$0xf]
    %v73 = vld [vmem:[%s1 + $0xc4] sm:$0xf]
    %v74 = vld [vmem:[%s1 + $0xc8] sm:$0xf]
    %v75 = vld [vmem:[%s1 + $0xcc] sm:$0xf]
    %v76 = vld [vmem:[%s1 + $0xd0] sm:$0xf]
    %v77 = vld [vmem:[%s1 + $0xd4] sm:$0xf]
    %v78 = vld [vmem:[%s1 + $0xd8] sm:$0xf]
    %v79 = vld [vmem:[%s1 + $0xdc] sm:$0xf]
    %v80 = vld [vmem:[%s1 + $0xe0] sm:$0xf]
    %v81 = vld [vmem:[%s1 + $0xe4] sm:$0xf]
    %v82 = vld [vmem:[%s1 + $0xe8] sm:$0xf]
    %v83 = vld [vmem:[%s1 + $0xec] sm:$0xf]
    %v84 = vld [vmem:[%s1 + $0xf0] sm:$0xf]
    %v85 = vld [vmem:[%s1 + $0xf4] sm:$0xf]
    %v86 = vld [vmem:[%s1 + $0xf8] sm:$0xf]
    %v87 = vld [vmem:[%s1 + $0xfc] sm:$0xf]
    %v88 = vld [vmem:[%s1 + $0x100] sm:$0xf]
    %v89 = vld [vmem:[%s1 + $0x104] sm:$0xf]
    %v90 = vld [vmem:[%s1 + $0x108] sm:$0xf]
    %v91 = vld [vmem:[%s1 + $0x10c] sm:$0xf]
    %v92 = vld [vmem:[%s1 + $0x110] sm:$0xf]
    %v93 = vld [vmem:[%s1 + $0x114] sm:$0xf]
    %v94 = vld [vmem:[%s1 + $0x118] sm:$0xf]
    %v95 = vld [vmem:[%s1 + $0x11c] sm:$0xf]
    %v96 = vld [vmem:[%s1 + $0x120] sm:$0xf]
    %v97 = vld [vmem:[%s1 + $0x124] sm:$0xf]
    %v98 = vld [vmem:[%s1 + $0x128] sm:$0xf]
    %v99 = vld [vmem:[%s1 + $0x12c] sm:$0xf]
    %v100 = vld [vmem:[%s1 + $0x130] sm:$0xf]
    %v101 = vld [vmem:[%s1 + $0x134] sm:$0xf]
    %v102 = vld [vmem:[%s1 + $0x138] sm:$0xf]
    %v103 = vld [vmem:[%s1 + $0x13c] sm:$0xf]
    %v104 = vld [vmem:[%s1 + $0x140] sm:$0xf]
    %v105 = vld [vmem:[%s1 + $0x144] sm:$0xf]
    %v106 = vld [vmem:[%s1 + $0x148] sm:$0xf]
    %v107 = vld [vmem:[%s1 + $0x14c] sm:$0xf]
    %v108 = vld [vmem:[%s1 + $0x150] sm:$0xf]
    %v109 = vld [vmem:[%s1 + $0x154] sm:$0xf]
    %v110 = vld [vmem:[%s1 + $0x158] sm:$0xf]
    %v111 = vld [vmem:[%s1 + $0x15c] sm:$0xf]
    %v112 = vld [vmem:[%s1 + $0x160] sm:$0xf]
    %v113 = vld [vmem:[%s1 + $0x164] sm:$0xf]
    %v114 = vld [vmem:[%s1 + $0x168] sm:$0xf]
    %v115 = vld [vmem:[%s1 + $0x16c] sm:$0xf]
    %v116 = vld [vmem:[%s1 + $0x170] sm:$0xf]
    %v117 = vld [vmem:[%s1 + $0x174] sm:$0xf]
    %v118 = vld [vmem:[%s1 + $0x178] sm:$0xf]
    %v119 = vld [vmem:[%s1 + $0x17c] sm:$0xf]
    %v120 = vld [vmem:[%s1 + $0x180] sm:$0xf]
    %v121 = vld [vmem:[%s1 + $0x184] sm:$0xf]
    %v122 = vld [vmem:[%s1 + $0x188] sm:$0xf]
    %v123 = vld [vmem:[%s1 + $0x18c] sm:$0xf]
    %v124 = vld [vmem:[%s1 + $0x190] sm:$0xf]
    %v125 = vld [vmem:[%s1 + $0x194] sm:$0xf]
    %v126 = vld [vmem:[%s1 + $0x198] sm:$0xf]
    %v127 = vld [vmem:[%s1 + $0x19c] sm:$0xf]
    %v128 = vld [vmem:[%s1 + $0x1a0] sm:$0xf]
    %v129 = vld [vmem:[%s1 + $0x1a4] sm:$0xf]
    %v130 = vld [vmem:[%s1 + $0x1a8] sm:$0xf]
    %v131 = vld [vmem:[%s1 + $0x1ac] sm:$0xf]
    %v132 = vld [vmem:[%s1 + $0x1b0] sm:$0xf]
    %v133 = vld [vmem:[%s1 + $0x1b4] sm:$0xf]
    %v134 = vld [vmem:[%s1 + $0x1b8] sm:$0xf]
    %v135 = vld [vmem:[%s1 + $0x1bc] sm:$0xf]
    %v136 = vld [vmem:[%s1 + $0x1c0] sm:$0xf]
    %v137 = vld [vmem:[%s1 + $0x1c4] sm:$0xf]
    %v138 = vld [vmem:[%s1 + $0x1c8] sm:$0xf]
    %v139 = vld [vmem:[%s1 + $0x1cc] sm:$0xf]
    %v140 = vld [vmem:[%s1 + $0x1d0] sm:$0xf]
    %v141 = vld [vmem:[%s1 + $0x1d4] sm:$0xf]
    %v142 = vld [vmem:[%s1 + $0x1d8] sm:$0xf]
    %v143 = vld [vmem:[%s1 + $0x1dc] sm:$0xf]
    %v144 = vld [vmem:[%s1 + $0x1e0] sm:$0xf]
    %v145 = vld [vmem:[%s1 + $0x1e4] sm:$0xf]
    %v146 = vld [vmem:[%s1 + $0x1e8] sm:$0xf]
    %v147 = vld [vmem:[%s1 + $0x1ec] sm:$0xf]
    %v148 = vld [vmem:[%s1 + $0x1f0] sm:$0xf]
    %v149 = vld [vmem:[%s1 + $0x1f4] sm:$0xf]
    %v150 = vld [vmem:[%s1 + $0x1f8] sm:$0xf]
    %v151 = vld [vmem:[%s1 + $0x1fc] sm:$0xf]
    %v152 = vld [vmem:[%s1 + $0x200] sm:$0xf]
    %v153 = vld [vmem:[%s1 + $0x204] sm:$0xf]
    %v154 = vld [vmem:[%s1 + $0x208] sm:$0xf]
    %v155 = vld [vmem:[%s1 + $0x20c] sm:$0xf]
    %v156 = vld [vmem:[%s1 + $0x210] sm:$0xf]
    %v157 = vld [vmem:[%s1 + $0x214] sm:$0xf]
    %v158 = vld [vmem:[%s1 + $0x218] sm:$0xf]
    %v159 = vld [vmem:[%s1 + $0x21c] sm:$0xf]
    %v160 = vld [vmem:[%s1 + $0x220] sm:$0xf]
    %v161 = vld [vmem:[%s1 + $0x224] sm:$0xf]
    %v162 = vld [vmem:[%s1 + $0x228] sm:$0xf]
    %v163 = vld [vmem:[%s1 + $0x22c] sm:$0xf]
    %v164 = vld [vmem:[%s1 + $0x230] sm:$0xf]
    %v165 = vld [vmem:[%s1 + $0x234] sm:$0xf]
    %v166 = vld [vmem:[%s1 + $0x238] sm:$0xf]
    %v167 = vld [vmem:[%s1 + $0x23c] sm:$0xf]
    %v168 = vld [vmem:[%s1 + $0x240] sm:$0xf]
    %v169 = vld [vmem:[%s1 + $0x244] sm:$0xf]
    %v170 = vld [vmem:[%s1 + $0x248] sm:$0xf]
    %v171 = vld [vmem:[%s1 + $0x24c] sm:$0xf]
    %v172 = vld [vmem:[%s1 + $0x250] sm:$0xf]
    %v173 = vld [vmem:[%s1 + $0x254] sm:$0xf]
    %v174 = vld [vmem:[%s1 + $0x258] sm:$0xf]
    %v175 = vld [vmem:[%s1 + $0x25c] sm:$0xf]
    %v176 = vld [vmem:[%s1 + $0x260] sm:$0xf]
    %v177 = vld [vmem:[%s1 + $0x264] sm:$0xf]
    %v178 = vld [vmem:[%s1 + $0x268] sm:$0xf]
    %v179 = vld [vmem:[%s1 + $0x26c] sm:$0xf]
    %v180 = vld [vmem:[%s1 + $0x270] sm:$0xf]
    %v181 = vld [vmem:[%s1 + $0x274] sm:$0xf]
    %v182 = vld [vmem:[%s1 + $0x278] sm:$0xf]
    %v183 = vld [vmem:[%s1 + $0x27c] sm:$0xf]
    %v184 = vld [vmem:[%s1 + $0x280] sm:$0xf]
    %v185 = vld [vmem:[%s1 + $0x284] sm:$0xf]
    %v186 = vld [vmem:[%s1 + $0x288] sm:$0xf]
    %v187 = vld [vmem:[%s1 + $0x28c] sm:$0xf]
    %v188 = vld [vmem:[%s1 + $0x290] sm:$0xf]
    %v189 = vld [vmem:[%s1 + $0x294] sm:$0xf]
    %v190 = vld [vmem:[%s1 + $0x298] sm:$0xf]
    %v191 = vld [vmem:[%s1 + $0x29c] sm:$0xf]
    %v192 = vld [vmem:[%s1 + $0x2a0] sm:$0xf]
    %v193 = vld [vmem:[%s1 + $0x2a4] sm:$0xf]
    %v194 = vld [vmem:[%s1 + $0x2a8] sm:$0xf]
    %v195 = vld [vmem:[%s1 + $0x2ac] sm:$0xf]
    %v196 = vld [vmem:[%s1 + $0x2b0] sm:$0xf]
    %v197 = vld [vmem:[%s1 + $0x2b4] sm:$0xf]
    %v198 = vld [vmem:[%s1 + $0x2b8] sm:$0xf]
    %v199 = vld [vmem:[%s1 + $0x2bc] sm:$0xf]
    %v200 = vld [vmem:[%s1 + $0x2c0] sm:$0xf]
    %v201 = vld [vmem:[%s1 + $0x2c4] sm:$0xf]
    %v202 = vld [vmem:[%s1 + $0x2c8] sm:$0xf]
    %v203 = vld [vmem:[%s1 + $0x2cc] sm:$0xf]
    %v204 = vld [vmem:[%s1 + $0x2d0] sm:$0xf]
    %v205 = vld [vmem:[%s1 + $0x2d4] sm:$0xf]
    %v206 = vld [vmem:[%s1 + $0x2d8] sm:$0xf]
    %v207 = vld [vmem:[%s1 + $0x2dc] sm:$0xf]
    %v208 = vld [vmem:[%s1 + $0x2e0] sm:$0xf]
    %v209 = vld [vmem:[%s1 + $0x2e4] sm:$0xf]
    %v210 = vld [vmem:[%s1 + $0x2e8] sm:$0xf]
    %v211 = vld [vmem:[%s1 + $0x2ec] sm:$0xf]
    %v212 = vld [vmem:[%s1 + $0x2f0] sm:$0xf]
    %v213 = vld [vmem:[%s1 + $0x2f4] sm:$0xf]
    %v214 = vld [vmem:[%s1 + $0x2f8] sm:$0xf]
    %v215 = vld [vmem:[%s1 + $0x2fc] sm:$0xf]
    %v216 = vld [vmem:[%s1 + $0x300] sm:$0xf]
    %v217 = vld [vmem:[%s1 + $0x304] sm:$0xf]
    %v218 = vld [vmem:[%s1 + $0x308] sm:$0xf]
    %v219 = vld [vmem:[%s1 + $0x30c] sm:$0xf]
    %v220 = vld [vmem:[%s2] sm:$0x1]
    %v222 = vlaneseq
    %v223 = vshrl.u32 %v222, 7
    %v224 = vsub.s32 0, %v223
    %v225 = vrot.slane %v220, %v224
    %v229 = vcombine.high %v22, %v22
    %v231 = vunpack.c.l.s4 1966171168
    %v232 = vunpack.c.0.s8 %v231
    %v233 = vlaneseq
    %v234 = vshrl.u32 %v233, 7
    %v235 = vsub.s32 %v232, %v234
    %v236 = vrot.slane %v22, %v235
    %v238 = vunpack.c.l.s4 1966171168
    %v239 = vunpack.c.0.s8 %v238
    %v240 = vlaneseq
    %v241 = vshrl.u32 %v240, 7
    %v242 = vsub.s32 %v239, %v241
    %v243 = vrot.slane %v229, %v242
    %v244 = vcombine.high %v236, %v236
    %v245 = vcombine.high %v243, %v243
    %v247 = vunpack.c.l.s4 1966171168
    %v248 = vunpack.c.0.s8 %v247
    %v249 = vlaneseq
    %v250 = vshrl.u32 %v249, 7
    %v251 = vsub.s32 %v248, %v250
    %v252 = vrot.slane %v236, %v251
    %v254 = vunpack.c.l.s4 1966171168
    %v255 = vunpack.c.0.s8 %v254
    %v256 = vlaneseq
    %v257 = vshrl.u32 %v256, 7
    %v258 = vsub.s32 %v255, %v257
    %v259 = vrot.slane %v243, %v258
    %v261 = vunpack.c.l.s4 1966171168
    %v262 = vunpack.c.0.s8 %v261
    %v263 = vlaneseq
    %v264 = vshrl.u32 %v263, 7
    %v265 = vsub.s32 %v262, %v264
    %v266 = vrot.slane %v244, %v265
    %v268 = vunpack.c.l.s4 1966171168
    %v269 = vunpack.c.0.s8 %v268
    %v270 = vlaneseq
    %v271 = vshrl.u32 %v270, 7
    %v272 = vsub.s32 %v269, %v271
    %v273 = vrot.slane %v245, %v272
    %v274 = vcombine.high %v252, %v252
    %v275 = vcombine.high %v259, %v259
    %v276 = vcombine.high %v266, %v266
    %v277 = vcombine.high %v273, %v273
    %v278 = vcombine.high %v23, %v23
    %v280 = vunpack.c.l.s4 1966171168
    %v281 = vunpack.c.0.s8 %v280
    %v282 = vlaneseq
    %v283 = vshrl.u32 %v282, 7
    %v284 = vsub.s32 %v281, %v283
    %v285 = vrot.slane %v23, %v284
    %v287 = vunpack.c.l.s4 1966171168
    %v288 = vunpack.c.0.s8 %v287
    %v289 = vlaneseq
    %v290 = vshrl.u32 %v289, 7
    %v291 = vsub.s32 %v288, %v290
    %v292 = vrot.slane %v278, %v291
    %v293 = vcombine.high %v285, %v285
    %v295 = vunpack.c.l.s4 1966171168
    %v296 = vunpack.c.0.s8 %v295
    %v297 = vlaneseq
    %v298 = vshrl.u32 %v297, 7
    %v299 = vsub.s32 %v296, %v298
    %v300 = vrot.slane %v285, %v299
    %v302 = vunpack.c.l.s4 1966171168
    %v303 = vunpack.c.0.s8 %v302
    %v304 = vlaneseq
    %v305 = vshrl.u32 %v304, 7
    %v306 = vsub.s32 %v303, %v305
    %v307 = vrot.slane %v292, %v306
    %v309 = vunpack.c.l.s4 1966171168
    %v310 = vunpack.c.0.s8 %v309
    %v311 = vlaneseq
    %v312 = vshrl.u32 %v311, 7
    %v313 = vsub.s32 %v310, %v312
    %v314 = vrot.slane %v293, %v313
    %v315 = vcombine.high %v300, %v300
    %v316 = vcombine.high %v314, %v314
    %v525 = vunpack.c.l.b16 %v24
    %v526 = vunpack.c.l.b16 %v25
    %v527 = vunpack.c.l.b16 %v26
    %v528 = vunpack.c.l.b16 %v27
    %v529 = vunpack.c.l.b16 %v28
    %v530 = vunpack.c.l.b16 %v29
    %v531 = vunpack.c.l.b16 %v30
    %v532 = vunpack.c.l.b16 %v31
    %v533 = vunpack.c.l.b16 %v32
    %v534 = vunpack.c.l.b16 %v33
    %v535 = vunpack.c.l.b16 %v34
    %v536 = vunpack.c.l.b16 %v35
    %v537 = vunpack.c.l.b16 %v36
    %v538 = vunpack.c.l.b16 %v37
    %v539 = vunpack.c.l.b16 %v38
    %v540 = vunpack.c.l.b16 %v39
    %v541 = vunpack.c.l.b16 %v40
    %v542 = vunpack.c.l.b16 %v41
    %v543 = vunpack.c.l.b16 %v42
    %v544 = vunpack.c.l.b16 %v43
    %v545 = vunpack.c.l.b16 %v44
    %v546 = vunpack.c.l.b16 %v45
    %v547 = vunpack.c.l.b16 %v46
    %v548 = vunpack.c.l.b16 %v47
    %v549 = vunpack.c.l.b16 %v48
    %v550 = vunpack.c.l.b16 %v49
    %v551 = vunpack.c.l.b16 %v50
    %v552 = vunpack.c.l.b16 %v51
    %v553 = vunpack.c.l.b16 %v52
    %v554 = vunpack.c.l.b16 %v53
    %v555 = vunpack.c.l.b16 %v54
    %v556 = vunpack.c.l.b16 %v55
    %v557 = vunpack.c.l.b16 %v56
    %v558 = vunpack.c.l.b16 %v57
    %v559 = vunpack.c.l.b16 %v58
    %v560 = vunpack.c.l.b16 %v59
    %v561 = vunpack.c.l.b16 %v60
    %v562 = vunpack.c.l.b16 %v61
    %v563 = vunpack.c.l.b16 %v62
    %v564 = vunpack.c.l.b16 %v63
    %v565 = vunpack.c.l.b16 %v64
    %v566 = vunpack.c.l.b16 %v65
    %v567 = vunpack.c.l.b16 %v66
    %v568 = vunpack.c.l.b16 %v67
    %v569 = vunpack.c.l.b16 %v68
    %v570 = vunpack.c.l.b16 %v69
    %v571 = vunpack.c.l.b16 %v70
    %v572 = vunpack.c.l.b16 %v71
    %v573 = vunpack.c.l.b16 %v72
    %v574 = vunpack.c.l.b16 %v73
    %v575 = vunpack.c.l.b16 %v74
    %v576 = vunpack.c.l.b16 %v75
    %v577 = vunpack.c.l.b16 %v76
    %v578 = vunpack.c.l.b16 %v77
    %v579 = vunpack.c.l.b16 %v78
    %v580 = vunpack.c.l.b16 %v79
    %v581 = vunpack.c.l.b16 %v80
    %v582 = vunpack.c.l.b16 %v81
    %v583 = vunpack.c.l.b16 %v82
    %v584 = vunpack.c.l.b16 %v83
    %v585 = vunpack.c.l.b16 %v84
    %v586 = vunpack.c.l.b16 %v85
    %v587 = vunpack.c.l.b16 %v86
    %v588 = vunpack.c.l.b16 %v87
    %v589 = vunpack.c.l.b16 %v88
    %v590 = vunpack.c.l.b16 %v89
    %v591 = vunpack.c.l.b16 %v90
    %v592 = vunpack.c.l.b16 %v91
    %v593 = vunpack.c.l.b16 %v92
    %v594 = vunpack.c.l.b16 %v93
    %v595 = vunpack.c.l.b16 %v94
    %v596 = vunpack.c.l.b16 %v95
    %v597 = vunpack.c.l.b16 %v96
    %v598 = vunpack.c.l.b16 %v97
    %v599 = vunpack.c.l.b16 %v98
    %v600 = vunpack.c.l.b16 %v99
    %v601 = vunpack.c.l.b16 %v100
    %v602 = vunpack.c.l.b16 %v101
    %v603 = vunpack.c.l.b16 %v102
    %v604 = vunpack.c.l.b16 %v103
    %v605 = vunpack.c.l.b16 %v104
    %v606 = vunpack.c.l.b16 %v105
    %v607 = vunpack.c.l.b16 %v106
    %v608 = vunpack.c.l.b16 %v107
    %v609 = vunpack.c.l.b16 %v108
    %v610 = vunpack.c.l.b16 %v109
    %v611 = vunpack.c.l.b16 %v110
    %v612 = vunpack.c.l.b16 %v111
    %v613 = vunpack.c.l.b16 %v112
    %v614 = vunpack.c.l.b16 %v113
    %v615 = vunpack.c.l.b16 %v114
    %v616 = vunpack.c.l.b16 %v115
    %v617 = vunpack.c.l.b16 %v116
    %v618 = vunpack.c.l.b16 %v117
    %v619 = vunpack.c.l.b16 %v118
    %v620 = vunpack.c.l.b16 %v119
    %v621 = vunpack.c.l.b16 %v120
    %v622 = vunpack.c.l.b16 %v121
    %v623 = vunpack.c.l.b16 %v122
    %v624 = vunpack.c.l.b16 %v123
    %v625 = vunpack.c.l.b16 %v124
    %v626 = vunpack.c.l.b16 %v125
    %v627 = vunpack.c.l.b16 %v126
    %v628 = vunpack.c.l.b16 %v127
    %v629 = vunpack.c.l.b16 %v128
    %v630 = vunpack.c.l.b16 %v129
    %v631 = vunpack.c.l.b16 %v130
    %v632 = vunpack.c.l.b16 %v131
    %v633 = vunpack.c.l.b16 %v132
    %v634 = vunpack.c.l.b16 %v133
    %v635 = vunpack.c.l.b16 %v134
    %v636 = vunpack.c.l.b16 %v135
    %v637 = vunpack.c.l.b16 %v136
    %v638 = vunpack.c.l.b16 %v137
    %v639 = vunpack.c.l.b16 %v138
    %v640 = vunpack.c.l.b16 %v139
    %v641 = vunpack.c.l.b16 %v140
    %v642 = vunpack.c.l.b16 %v141
    %v643 = vunpack.c.l.b16 %v142
    %v644 = vunpack.c.l.b16 %v143
    %v645 = vunpack.c.l.b16 %v144
    %v646 = vunpack.c.l.b16 %v145
    %v647 = vunpack.c.l.b16 %v146
    %v648 = vunpack.c.l.b16 %v147
    %v649 = vunpack.c.l.b16 %v148
    %v650 = vunpack.c.l.b16 %v149
    %v651 = vunpack.c.l.b16 %v150
    %v652 = vunpack.c.l.b16 %v151
    %v653 = vunpack.c.l.b16 %v152
    %v654 = vunpack.c.l.b16 %v153
    %v655 = vunpack.c.l.b16 %v154
    %v656 = vunpack.c.l.b16 %v155
    %v657 = vunpack.c.l.b16 %v156
    %v658 = vunpack.c.l.b16 %v157
    %v659 = vunpack.c.l.b16 %v158
    %v660 = vunpack.c.l.b16 %v159
    %v661 = vunpack.c.l.b16 %v160
    %v662 = vunpack.c.l.b16 %v161
    %v663 = vunpack.c.l.b16 %v162
    %v664 = vunpack.c.l.b16 %v163
    %v665 = vunpack.c.l.b16 %v164
    %v666 = vunpack.c.l.b16 %v165
    %v667 = vunpack.c.l.b16 %v166
    %v668 = vunpack.c.l.b16 %v167
    %v669 = vunpack.c.l.b16 %v168
    %v670 = vunpack.c.l.b16 %v169
    %v671 = vunpack.c.l.b16 %v170
    %v672 = vunpack.c.l.b16 %v171
    %v673 = vunpack.c.l.b16 %v172
    %v674 = vunpack.c.l.b16 %v173
    %v675 = vunpack.c.l.b16 %v174
    %v676 = vunpack.c.l.b16 %v175
    %v677 = vunpack.c.l.b16 %v176
    %v678 = vunpack.c.l.b16 %v177
    %v679 = vunpack.c.l.b16 %v178
    %v680 = vunpack.c.l.b16 %v179
    %v681 = vunpack.c.l.b16 %v180
    %v682 = vunpack.c.l.b16 %v181
    %v683 = vunpack.c.l.b16 %v182
    %v684 = vunpack.c.l.b16 %v183
    %v685 = vunpack.c.l.b16 %v184
    %v686 = vunpack.c.l.b16 %v185
    %v687 = vunpack.c.l.b16 %v186
    %v688 = vunpack.c.l.b16 %v187
    %v689 = vunpack.c.l.b16 %v188
    %v690 = vunpack.c.l.b16 %v189
    %v691 = vunpack.c.l.b16 %v190
    %v692 = vunpack.c.l.b16 %v191
    %v693 = vunpack.c.l.b16 %v192
    %v694 = vunpack.c.l.b16 %v193
    %v695 = vunpack.c.l.b16 %v194
    %v696 = vunpack.c.l.b16 %v195
    %v697 = vunpack.c.l.b16 %v196
    %v698 = vunpack.c.l.b16 %v197
    %v699 = vunpack.c.l.b16 %v198
    %v700 = vunpack.c.l.b16 %v199
    %v701 = vunpack.c.l.b16 %v200
    %v702 = vunpack.c.l.b16 %v201
    %v703 = vunpack.c.l.b16 %v202
    %v704 = vunpack.c.l.b16 %v203
    %v705 = vunpack.c.l.b16 %v204
    %v706 = vunpack.c.l.b16 %v205
    %v707 = vunpack.c.l.b16 %v206
    %v708 = vunpack.c.l.b16 %v207
    %v709 = vunpack.c.l.b16 %v208
    %v710 = vunpack.c.l.b16 %v209
    %v711 = vunpack.c.l.b16 %v210
    %v712 = vunpack.c.l.b16 %v211
    %v713 = vunpack.c.l.b16 %v212
    %v714 = vunpack.c.l.b16 %v213
    %v715 = vunpack.c.l.b16 %v214
    %v716 = vunpack.c.l.b16 %v215
    %v717 = vunpack.c.l.b16 %v216
    %v718 = vunpack.c.l.b16 %v217
    %v719 = vunpack.c.l.b16 %v218
    %v720 = vunpack.c.l.b16 %v219
    %v721 = vpack.c.b16 %v526, %v525
    %v722 = vpack.c.b16 %v528, %v527
    %v723 = vpack.c.b16 %v530, %v529
    %v724 = vpack.c.b16 %v532, %v531
    %v725 = vpack.c.b16 %v534, %v533
    %v726 = vpack.c.b16 %v536, %v535
    %v727 = vpack.c.b16 %v538, %v537
    %v728 = vpack.c.b16 %v540, %v539
    %v729 = vpack.c.b16 %v542, %v541
    %v730 = vpack.c.b16 %v544, %v543
    %v731 = vpack.c.b16 %v546, %v545
    %v732 = vpack.c.b16 %v548, %v547
    %v733 = vpack.c.b16 %v550, %v549
    %v734 = vpack.c.b16 %v552, %v551
    %v735 = vpack.c.b16 %v554, %v553
    %v736 = vpack.c.b16 %v556, %v555
    %v737 = vpack.c.b16 %v558, %v557
    %v738 = vpack.c.b16 %v560, %v559
    %v739 = vpack.c.b16 %v562, %v561
    %v740 = vpack.c.b16 %v564, %v563
    %v741 = vpack.c.b16 %v566, %v565
    %v742 = vpack.c.b16 %v568, %v567
    %v743 = vpack.c.b16 %v570, %v569
    %v744 = vpack.c.b16 %v572, %v571
    %v745 = vpack.c.b16 %v574, %v573
    %v746 = vpack.c.b16 %v576, %v575
    %v747 = vpack.c.b16 %v578, %v577
    %v748 = vpack.c.b16 %v580, %v579
    %v749 = vpack.c.b16 %v582, %v581
    %v750 = vpack.c.b16 %v584, %v583
    %v751 = vpack.c.b16 %v586, %v585
    %v752 = vpack.c.b16 %v588, %v587
    %v753 = vpack.c.b16 %v590, %v589
    %v754 = vpack.c.b16 %v592, %v591
    %v755 = vpack.c.b16 %v594, %v593
    %v756 = vpack.c.b16 %v596, %v595
    %v757 = vpack.c.b16 %v598, %v597
    %v758 = vpack.c.b16 %v600, %v599
    %v759 = vpack.c.b16 %v602, %v601
    %v760 = vpack.c.b16 %v604, %v603
    %v761 = vpack.c.b16 %v606, %v605
    %v762 = vpack.c.b16 %v608, %v607
    %v763 = vpack.c.b16 %v610, %v609
    %v764 = vpack.c.b16 %v612, %v611
    %v765 = vpack.c.b16 %v614, %v613
    %v766 = vpack.c.b16 %v616, %v615
    %v767 = vpack.c.b16 %v618, %v617
    %v768 = vpack.c.b16 %v620, %v619
    %v769 = vpack.c.b16 %v622, %v621
    %v770 = vpack.c.b16 %v624, %v623
    %v771 = vpack.c.b16 %v626, %v625
    %v772 = vpack.c.b16 %v628, %v627
    %v773 = vpack.c.b16 %v630, %v629
    %v774 = vpack.c.b16 %v632, %v631
    %v775 = vpack.c.b16 %v634, %v633
    %v776 = vpack.c.b16 %v636, %v635
    %v777 = vpack.c.b16 %v638, %v637
    %v778 = vpack.c.b16 %v640, %v639
    %v779 = vpack.c.b16 %v642, %v641
    %v780 = vpack.c.b16 %v644, %v643
    %v781 = vpack.c.b16 %v646, %v645
    %v782 = vpack.c.b16 %v648, %v647
    %v783 = vpack.c.b16 %v650, %v649
    %v784 = vpack.c.b16 %v652, %v651
    %v785 = vpack.c.b16 %v654, %v653
    %v786 = vpack.c.b16 %v656, %v655
    %v787 = vpack.c.b16 %v658, %v657
    %v788 = vpack.c.b16 %v660, %v659
    %v789 = vpack.c.b16 %v662, %v661
    %v790 = vpack.c.b16 %v664, %v663
    %v791 = vpack.c.b16 %v666, %v665
    %v792 = vpack.c.b16 %v668, %v667
    %v793 = vpack.c.b16 %v670, %v669
    %v794 = vpack.c.b16 %v672, %v671
    %v795 = vpack.c.b16 %v674, %v673
    %v796 = vpack.c.b16 %v676, %v675
    %v797 = vpack.c.b16 %v678, %v677
    %v798 = vpack.c.b16 %v680, %v679
    %v799 = vpack.c.b16 %v682, %v681
    %v800 = vpack.c.b16 %v684, %v683
    %v801 = vpack.c.b16 %v686, %v685
    %v802 = vpack.c.b16 %v688, %v687
    %v803 = vpack.c.b16 %v690, %v689
    %v804 = vpack.c.b16 %v692, %v691
    %v805 = vpack.c.b16 %v694, %v693
    %v806 = vpack.c.b16 %v696, %v695
    %v807 = vpack.c.b16 %v698, %v697
    %v808 = vpack.c.b16 %v700, %v699
    %v809 = vpack.c.b16 %v702, %v701
    %v810 = vpack.c.b16 %v704, %v703
    %v811 = vpack.c.b16 %v706, %v705
    %v812 = vpack.c.b16 %v708, %v707
    %v813 = vpack.c.b16 %v710, %v709
    %v814 = vpack.c.b16 %v712, %v711
    %v815 = vpack.c.b16 %v714, %v713
    %v816 = vpack.c.b16 %v716, %v715
    %v817 = vpack.c.b16 %v718, %v717
    %v818 = vpack.c.b16 %v720, %v719
    %vm917 = vcmask 261120
    %v919 = vsel %vm917, %v307, 0
    %921 = vmatprep.subr.bf16.mxu0 0
    %922 = vmatpush1.bf16.msra.mxu0 %v721
    %923 = vmatprep.subr.bf16.mxu0 0
    %924 = vmatpush1.bf16.msra.mxu0 %v722
    %925 = vmatprep.subr.bf16.mxu0 0
    %926 = vmatpush1.bf16.msra.mxu0 %v723
    %927 = vmatprep.subr.bf16.mxu0 0
    %928 = vmatpush1.bf16.msra.mxu0 %v724
    %929 = vmatprep.subr.bf16.mxu0 0
    %930 = vmatpush1.bf16.msra.mxu0 %v725
    %931 = vmatprep.subr.bf16.mxu0 0
    %932 = vmatpush1.bf16.msra.mxu0 %v726
    %933 = vmatprep.subr.bf16.mxu0 0
    %934 = vmatpush1.bf16.msra.mxu0 %v727
    %935 = vmatprep.subr.bf16.mxu0 0
    %936 = vmatpush1.bf16.msra.mxu0 %v728
    %937 = vmatprep.subr.bf16.mxu0 0
    %938 = vmatpush1.bf16.msra.mxu0 %v729
    %939 = vmatprep.subr.bf16.mxu0 0
    %940 = vmatpush1.bf16.msra.mxu0 %v730
    %941 = vmatprep.subr.bf16.mxu0 0
    %942 = vmatpush1.bf16.msra.mxu0 %v731
    %943 = vmatprep.subr.bf16.mxu0 0
    %944 = vmatpush1.bf16.msra.mxu0 %v732
    %945 = vmatprep.subr.bf16.mxu0 0
    %946 = vmatpush1.bf16.msra.mxu0 %v733
    %947 = vmatprep.subr.bf16.mxu0 0
    %948 = vmatpush1.bf16.msra.mxu0 %v734
    %949 = vmatprep.subr.bf16.mxu0 0
    %950 = vmatpush1.bf16.msra.mxu0 %v735
    %951 = vmatprep.subr.bf16.mxu0 0
    %952 = vmatpush1.bf16.msra.mxu0 %v736
    %953 = vmatprep.mubr.bf16.mxu0 %v266
    %954 = vmatmul.mubr.bf16.gmra.mrb[0].mxu0 %v252
    %v955 = vpop.f32.mrb[0].mxu0
    %v956 = vadd.f32 %v225, %v955
    %v957 = vpop.f32.mrb[0].mxu0
    %v958 = vpop.f32.mrb[0].mxu0
    %v959 = vpop.f32.mrb[0].mxu0
    %960 = vdwg.mxu0
    %961 = vmatprep.subr.bf16.mxu0 0
    %962 = vmatpush1.bf16.msra.mxu0 %v737
    %963 = vmatprep.subr.bf16.mxu0 0
    %964 = vmatpush1.bf16.msra.mxu0 %v738
    %965 = vmatprep.subr.bf16.mxu0 0
    %966 = vmatpush1.bf16.msra.mxu0 %v739
    %967 = vmatprep.subr.bf16.mxu0 0
    %968 = vmatpush1.bf16.msra.mxu0 %v740
    %969 = vmatprep.subr.bf16.mxu0 0
    %970 = vmatpush1.bf16.msra.mxu0 %v741
    %971 = vmatprep.subr.bf16.mxu0 0
    %972 = vmatpush1.bf16.msra.mxu0 %v742
    %973 = vmatprep.subr.bf16.mxu0 0
    %974 = vmatpush1.bf16.msra.mxu0 %v743
    %975 = vmatprep.subr.bf16.mxu0 0
    %976 = vmatpush1.bf16.msra.mxu0 %v744
    %977 = vmatprep.subr.bf16.mxu0 0
    %978 = vmatpush1.bf16.msra.mxu0 %v745
    %979 = vmatprep.subr.bf16.mxu0 0
    %980 = vmatpush1.bf16.msra.mxu0 %v746
    %981 = vmatprep.subr.bf16.mxu0 0
    %982 = vmatpush1.bf16.msra.mxu0 %v747
    %983 = vmatprep.subr.bf16.mxu0 0
    %984 = vmatpush1.bf16.msra.mxu0 %v748
    %985 = vmatprep.subr.bf16.mxu0 0
    %986 = vmatpush1.bf16.msra.mxu0 %v749
    %987 = vmatprep.subr.bf16.mxu0 0
    %988 = vmatpush1.bf16.msra.mxu0 %v750
    %989 = vmatprep.subr.bf16.mxu0 0
    %990 = vmatpush1.bf16.msra.mxu0 %v751
    %991 = vmatprep.subr.bf16.mxu0 0
    %992 = vmatpush1.bf16.msra.mxu0 %v752
    %993 = vmatprep.mubr.bf16.mxu0 %v276
    %994 = vmatmul.mubr.bf16.gmra.mrb[0].mxu0 %v274
    %v995 = vpop.f32.mrb[0].mxu0
    %v996 = vadd.f32 %v956, %v995
    %v997 = vpop.f32.mrb[0].mxu0
    %v998 = vpop.f32.mrb[0].mxu0
    %v999 = vpop.f32.mrb[0].mxu0
    %1000 = vdwg.mxu0
    %1001 = vmatprep.subr.bf16.mxu0 0
    %1002 = vmatpush1.bf16.msra.mxu0 %v753
    %1003 = vmatprep.subr.bf16.mxu0 0
    %1004 = vmatpush1.bf16.msra.mxu0 %v754
    %1005 = vmatprep.subr.bf16.mxu0 0
    %1006 = vmatpush1.bf16.msra.mxu0 %v755
    %1007 = vmatprep.subr.bf16.mxu0 0
    %1008 = vmatpush1.bf16.msra.mxu0 %v756
    %1009 = vmatprep.subr.bf16.mxu0 0
    %1010 = vmatpush1.bf16.msra.mxu0 %v757
    %1011 = vmatprep.subr.bf16.mxu0 0
    %1012 = vmatpush1.bf16.msra.mxu0 %v758
    %1013 = vmatprep.subr.bf16.mxu0 0
    %1014 = vmatpush1.bf16.msra.mxu0 %v759
    %1015 = vmatprep.subr.bf16.mxu0 0
    %1016 = vmatpush1.bf16.msra.mxu0 %v760
    %1017 = vmatprep.subr.bf16.mxu0 0
    %1018 = vmatpush1.bf16.msra.mxu0 %v761
    %1019 = vmatprep.subr.bf16.mxu0 0
    %1020 = vmatpush1.bf16.msra.mxu0 %v762
    %1021 = vmatprep.subr.bf16.mxu0 0
    %1022 = vmatpush1.bf16.msra.mxu0 %v763
    %1023 = vmatprep.subr.bf16.mxu0 0
    %1024 = vmatpush1.bf16.msra.mxu0 %v764
    %1025 = vmatprep.subr.bf16.mxu0 0
    %1026 = vmatpush1.bf16.msra.mxu0 %v765
    %1027 = vmatprep.subr.bf16.mxu0 0
    %1028 = vmatpush1.bf16.msra.mxu0 %v766
    %1029 = vmatprep.subr.bf16.mxu0 0
    %1030 = vmatpush1.bf16.msra.mxu0 %v767
    %1031 = vmatprep.subr.bf16.mxu0 0
    %1032 = vmatpush1.bf16.msra.mxu0 %v768
    %1033 = vmatprep.mubr.bf16.mxu0 %v273
    %1034 = vmatmul.mubr.bf16.gmra.mrb[0].mxu0 %v259
    %v1035 = vpop.f32.mrb[0].mxu0
    %v1036 = vadd.f32 %v996, %v1035
    %v1037 = vpop.f32.mrb[0].mxu0
    %v1038 = vpop.f32.mrb[0].mxu0
    %v1039 = vpop.f32.mrb[0].mxu0
    %1040 = vdwg.mxu0
    %1041 = vmatprep.subr.bf16.mxu0 0
    %1042 = vmatpush1.bf16.msra.mxu0 %v769
    %1043 = vmatprep.subr.bf16.mxu0 0
    %1044 = vmatpush1.bf16.msra.mxu0 %v770
    %1045 = vmatprep.subr.bf16.mxu0 0
    %1046 = vmatpush1.bf16.msra.mxu0 %v771
    %1047 = vmatprep.subr.bf16.mxu0 0
    %1048 = vmatpush1.bf16.msra.mxu0 %v772
    %1049 = vmatprep.subr.bf16.mxu0 0
    %1050 = vmatpush1.bf16.msra.mxu0 %v773
    %1051 = vmatprep.subr.bf16.mxu0 0
    %1052 = vmatpush1.bf16.msra.mxu0 %v774
    %1053 = vmatprep.subr.bf16.mxu0 0
    %1054 = vmatpush1.bf16.msra.mxu0 %v775
    %1055 = vmatprep.subr.bf16.mxu0 0
    %1056 = vmatpush1.bf16.msra.mxu0 %v776
    %1057 = vmatprep.subr.bf16.mxu0 0
    %1058 = vmatpush1.bf16.msra.mxu0 %v777
    %1059 = vmatprep.subr.bf16.mxu0 0
    %1060 = vmatpush1.bf16.msra.mxu0 %v778
    %1061 = vmatprep.subr.bf16.mxu0 0
    %1062 = vmatpush1.bf16.msra.mxu0 %v779
    %1063 = vmatprep.subr.bf16.mxu0 0
    %1064 = vmatpush1.bf16.msra.mxu0 %v780
    %1065 = vmatprep.subr.bf16.mxu0 0
    %1066 = vmatpush1.bf16.msra.mxu0 %v781
    %1067 = vmatprep.subr.bf16.mxu0 0
    %1068 = vmatpush1.bf16.msra.mxu0 %v782
    %1069 = vmatprep.subr.bf16.mxu0 0
    %1070 = vmatpush1.bf16.msra.mxu0 %v783
    %1071 = vmatprep.subr.bf16.mxu0 0
    %1072 = vmatpush1.bf16.msra.mxu0 %v784
    %1073 = vmatprep.mubr.bf16.mxu0 %v277
    %1074 = vmatmul.mubr.bf16.gmra.mrb[0].mxu0 %v275
    %v1075 = vpop.f32.mrb[0].mxu0
    %v1076 = vadd.f32 %v1036, %v1075
    %v1077 = vpop.f32.mrb[0].mxu0
    %v1078 = vpop.f32.mrb[0].mxu0
    %v1079 = vpop.f32.mrb[0].mxu0
    %1080 = vdwg.mxu0
    %1081 = vmatprep.subr.bf16.mxu0 0
    %1082 = vmatpush1.bf16.msra.mxu0 %v785
    %1083 = vmatprep.subr.bf16.mxu0 0
    %1084 = vmatpush1.bf16.msra.mxu0 %v786
    %1085 = vmatprep.subr.bf16.mxu0 0
    %1086 = vmatpush1.bf16.msra.mxu0 %v787
    %1087 = vmatprep.subr.bf16.mxu0 0
    %1088 = vmatpush1.bf16.msra.mxu0 %v788
    %1089 = vmatprep.subr.bf16.mxu0 0
    %1090 = vmatpush1.bf16.msra.mxu0 %v789
    %1091 = vmatprep.subr.bf16.mxu0 0
    %1092 = vmatpush1.bf16.msra.mxu0 %v790
    %1093 = vmatprep.subr.bf16.mxu0 0
    %1094 = vmatpush1.bf16.msra.mxu0 %v791
    %1095 = vmatprep.subr.bf16.mxu0 0
    %1096 = vmatpush1.bf16.msra.mxu0 %v792
    %1097 = vmatprep.subr.bf16.mxu0 0
    %1098 = vmatpush1.bf16.msra.mxu0 %v793
    %1099 = vmatprep.subr.bf16.mxu0 0
    %1100 = vmatpush1.bf16.msra.mxu0 %v794
    %1101 = vmatprep.subr.bf16.mxu0 0
    %1102 = vmatpush1.bf16.msra.mxu0 %v795
    %1103 = vmatprep.subr.bf16.mxu0 0
    %1104 = vmatpush1.bf16.msra.mxu0 %v796
    %1105 = vmatprep.subr.bf16.mxu0 0
    %1106 = vmatpush1.bf16.msra.mxu0 %v797
    %1107 = vmatprep.subr.bf16.mxu0 0
    %1108 = vmatpush1.bf16.msra.mxu0 %v798
    %1109 = vmatprep.subr.bf16.mxu0 0
    %1110 = vmatpush1.bf16.msra.mxu0 %v799
    %1111 = vmatprep.subr.bf16.mxu0 0
    %1112 = vmatpush1.bf16.msra.mxu0 %v800
    %1113 = vmatprep.mubr.bf16.mxu0 %v314
    %1114 = vmatmul.mubr.bf16.gmra.mrb[0].mxu0 %v300
    %v1115 = vpop.f32.mrb[0].mxu0
    %v1116 = vadd.f32 %v1076, %v1115
    %v1117 = vpop.f32.mrb[0].mxu0
    %v1118 = vpop.f32.mrb[0].mxu0
    %v1119 = vpop.f32.mrb[0].mxu0
    %1120 = vdwg.mxu0
    %1121 = vmatprep.subr.bf16.mxu0 0
    %1122 = vmatpush1.bf16.msra.mxu0 %v801
    %1123 = vmatprep.subr.bf16.mxu0 0
    %1124 = vmatpush1.bf16.msra.mxu0 %v802
    %1125 = vmatprep.subr.bf16.mxu0 0
    %1126 = vmatpush1.bf16.msra.mxu0 %v803
    %1127 = vmatprep.subr.bf16.mxu0 0
    %1128 = vmatpush1.bf16.msra.mxu0 %v804
    %1129 = vmatprep.subr.bf16.mxu0 0
    %1130 = vmatpush1.bf16.msra.mxu0 %v805
    %1131 = vmatprep.subr.bf16.mxu0 0
    %1132 = vmatpush1.bf16.msra.mxu0 %v806
    %1133 = vmatprep.subr.bf16.mxu0 0
    %1134 = vmatpush1.bf16.msra.mxu0 %v807
    %1135 = vmatprep.subr.bf16.mxu0 0
    %1136 = vmatpush1.bf16.msra.mxu0 %v808
    %1137 = vmatprep.subr.bf16.mxu0 0
    %1138 = vmatpush1.bf16.msra.mxu0 %v809
    %1139 = vmatprep.subr.bf16.mxu0 0
    %1140 = vmatpush1.bf16.msra.mxu0 %v810
    %1141 = vmatprep.subr.bf16.mxu0 0
    %1142 = vmatpush1.bf16.msra.mxu0 %v811
    %1143 = vmatprep.subr.bf16.mxu0 0
    %1144 = vmatpush1.bf16.msra.mxu0 %v812
    %1145 = vmatprep.subr.bf16.mxu0 0
    %1146 = vmatpush1.bf16.msra.mxu0 %v813
    %1147 = vmatprep.subr.bf16.mxu0 0
    %1148 = vmatpush1.bf16.msra.mxu0 %v814
    %1149 = vmatprep.subr.bf16.mxu0 0
    %1150 = vmatpush1.bf16.msra.mxu0 %v815
    %1151 = vmatprep.subr.bf16.mxu0 0
    %1152 = vmatpush1.bf16.msra.mxu0 %v816
    %1153 = vmatprep.mubr.bf16.mxu0 %v316
    %1154 = vmatmul.mubr.bf16.gmra.mrb[0].mxu0 %v315
    %v1155 = vpop.f32.mrb[0].mxu0
    %v1156 = vadd.f32 %v1116, %v1155
    %v1157 = vpop.f32.mrb[0].mxu0
    %v1158 = vpop.f32.mrb[0].mxu0
    %v1159 = vpop.f32.mrb[0].mxu0
    %1160 = vdwg.mxu0
    %1161 = vmatprep.subr.bf16.mxu0 0
    %1162 = vmatpush1.bf16.msra.mxu0 %v817
    %1163 = vmatprep.subr.bf16.mxu0 0
    %1164 = vmatpush1.bf16.msra.mxu0 %v818
    %1165 = vmatprep.subr.bf16.mxu0 0
    %1166 = vmatpush1.bf16.msra.mxu0 0
    %1167 = vmatprep.subr.bf16.mxu0 0
    %1168 = vmatpush1.bf16.msra.mxu0 0
    %1169 = vmatprep.subr.bf16.mxu0 0
    %1170 = vmatpush1.bf16.msra.mxu0 0
    %1171 = vmatprep.subr.bf16.mxu0 0
    %1172 = vmatpush1.bf16.msra.mxu0 0
    %1173 = vmatprep.subr.bf16.mxu0 0
    %1174 = vmatpush1.bf16.msra.mxu0 0
    %1175 = vmatprep.subr.bf16.mxu0 0
    %1176 = vmatpush1.bf16.msra.mxu0 0
    %1177 = vmatprep.subr.bf16.mxu0 0
    %1178 = vmatpush1.bf16.msra.mxu0 0
    %1179 = vmatprep.subr.bf16.mxu0 0
    %1180 = vmatpush1.bf16.msra.mxu0 0
    %1181 = vmatprep.subr.bf16.mxu0 0
    %1182 = vmatpush1.bf16.msra.mxu0 0
    %1183 = vmatprep.subr.bf16.mxu0 0
    %1184 = vmatpush1.bf16.msra.mxu0 0
    %1185 = vmatprep.subr.bf16.mxu0 0
    %1186 = vmatpush1.bf16.msra.mxu0 0
    %1187 = vmatprep.subr.bf16.mxu0 0
    %1188 = vmatpush1.bf16.msra.mxu0 0
    %1189 = vmatprep.subr.bf16.mxu0 0
    %1190 = vmatpush1.bf16.msra.mxu0 0
    %1191 = vmatprep.subr.bf16.mxu0 0
    %1192 = vmatpush1.bf16.msra.mxu0 0
    %1193 = vmatprep.mubr.bf16.mxu0 0
    %1194 = vmatmul.mubr.bf16.gmra.mrb[0].mxu0 %v919
    %v1195 = vpop.f32.mrb[0].mxu0
    %v1196 = vadd.f32 %v1156, %v1195
    %v1197 = vpop.f32.mrb[0].mxu0
    %v1198 = vpop.f32.mrb[0].mxu0
    %v1199 = vpop.f32.mrb[0].mxu0
    %1200 = vdwg.mxu0
    %v1201 = vmax.f32 %v1196, 0.0
    %v1202 = vpack.c.bf16 %v1201, %v1201
    %v1203 = vld [vmem:[%s3] sm:$0xf]
    %v1204 = vld [vmem:[%s3 + $0x4] sm:$0xf]
    %v1205 = vld [vmem:[%s3 + $0x8] sm:$0xf]
    %v1206 = vld [vmem:[%s3 + $0xc] sm:$0xf]
    %v1207 = vld [vmem:[%s3 + $0x10] sm:$0xf]
    %v1208 = vld [vmem:[%s3 + $0x14] sm:$0xf]
    %v1209 = vld [vmem:[%s3 + $0x18] sm:$0xf]
    %v1210 = vld [vmem:[%s3 + $0x1c] sm:$0xf]
    %v1211 = vld [vmem:[%s3 + $0x20] sm:$0xf]
    %v1212 = vld [vmem:[%s3 + $0x24] sm:$0xf]
    %v1213 = vld [vmem:[%s3 + $0x28] sm:$0xf]
    %v1214 = vld [vmem:[%s3 + $0x2c] sm:$0xf]
    %v1215 = vld [vmem:[%s3 + $0x30] sm:$0xf]
    %v1216 = vld [vmem:[%s3 + $0x34] sm:$0xf]
    %v1217 = vld [vmem:[%s3 + $0x38] sm:$0xf]
    %v1218 = vld [vmem:[%s3 + $0x3c] sm:$0xf]
    %v1219 = vld [vmem:[%s4] sm:$0x1]
    %v1221 = vlaneseq
    %v1222 = vshrl.u32 %v1221, 7
    %v1223 = vsub.s32 0, %v1222
    %v1224 = vrot.slane %v1219, %v1223
    %v1242 = vunpack.c.l.b16 %v1203
    %v1243 = vunpack.c.l.b16 %v1204
    %v1244 = vunpack.c.l.b16 %v1205
    %v1245 = vunpack.c.l.b16 %v1206
    %v1246 = vunpack.c.l.b16 %v1207
    %v1247 = vunpack.c.l.b16 %v1208
    %v1248 = vunpack.c.l.b16 %v1209
    %v1249 = vunpack.c.l.b16 %v1210
    %v1250 = vunpack.c.l.b16 %v1211
    %v1251 = vunpack.c.l.b16 %v1212
    %v1252 = vunpack.c.l.b16 %v1213
    %v1253 = vunpack.c.l.b16 %v1214
    %v1254 = vunpack.c.l.b16 %v1215
    %v1255 = vunpack.c.l.b16 %v1216
    %v1256 = vunpack.c.l.b16 %v1217
    %v1257 = vunpack.c.l.b16 %v1218
    %v1258 = vpack.c.b16 %v1243, %v1242
    %v1259 = vpack.c.b16 %v1245, %v1244
    %v1260 = vpack.c.b16 %v1247, %v1246
    %v1261 = vpack.c.b16 %v1249, %v1248
    %v1262 = vpack.c.b16 %v1251, %v1250
    %v1263 = vpack.c.b16 %v1253, %v1252
    %v1264 = vpack.c.b16 %v1255, %v1254
    %v1265 = vpack.c.b16 %v1257, %v1256
    %1274 = vmatprep.subr.bf16.mxu0 0
    %1275 = vmatpush1.bf16.msra.mxu0 %v1258
    %1276 = vmatprep.subr.bf16.mxu0 0
    %1277 = vmatpush1.bf16.msra.mxu0 %v1259
    %1278 = vmatprep.subr.bf16.mxu0 0
    %1279 = vmatpush1.bf16.msra.mxu0 %v1260
    %1280 = vmatprep.subr.bf16.mxu0 0
    %1281 = vmatpush1.bf16.msra.mxu0 %v1261
    %1282 = vmatprep.subr.bf16.mxu0 0
    %1283 = vmatpush1.bf16.msra.mxu0 %v1262
    %1284 = vmatprep.subr.bf16.mxu0 0
    %1285 = vmatpush1.bf16.msra.mxu0 %v1263
    %1286 = vmatprep.subr.bf16.mxu0 0
    %1287 = vmatpush1.bf16.msra.mxu0 %v1264
    %1288 = vmatprep.subr.bf16.mxu0 0
    %1289 = vmatpush1.bf16.msra.mxu0 %v1265
    %1290 = vmatprep.subr.bf16.mxu0 0
    %1291 = vmatpush1.bf16.msra.mxu0 0
    %1292 = vmatprep.subr.bf16.mxu0 0
    %1293 = vmatpush1.bf16.msra.mxu0 0
    %1294 = vmatprep.subr.bf16.mxu0 0
    %1295 = vmatpush1.bf16.msra.mxu0 0
    %1296 = vmatprep.subr.bf16.mxu0 0
    %1297 = vmatpush1.bf16.msra.mxu0 0
    %1298 = vmatprep.subr.bf16.mxu0 0
    %1299 = vmatpush1.bf16.msra.mxu0 0
    %1300 = vmatprep.subr.bf16.mxu0 0
    %1301 = vmatpush1.bf16.msra.mxu0 0
    %1302 = vmatprep.subr.bf16.mxu0 0
    %1303 = vmatpush1.bf16.msra.mxu0 0
    %1304 = vmatprep.subr.bf16.mxu0 0
    %1305 = vmatpush1.bf16.msra.mxu0 0
    %1306 = vmatprep.mubr.bf16.mxu0 0
    %1307 = vmatmul.mubr.bf16.gmra.mrb[0].mxu0 %v1202
    %v1308 = vpop.f32.mrb[0].mxu0
    %v1309 = vadd.f32 %v1224, %v1308
    %v1310 = vpop.f32.mrb[0].mxu0
    %v1311 = vpop.f32.mrb[0].mxu0
    %v1312 = vpop.f32.mrb[0].mxu0
    %1313 = vdwg.mxu0
    %vm1314 = vcmask 74752
    %1315 = vst.msk [vmem:[#allocation2] sm:$0x3] %vm1314, %v1309
    // Predicated region
    $region22: #{norm_short_net_forward.5} parent=1 // pred_check
      _
    $region23: #{norm_short_net_forward.5} parent=1 // pred_check_branch
      %1317 = sbr.rel (0) target = $region25
    $region24: #{norm_short_net_forward.5} parent=1 // pred_region
      %s1319 = ssub.s32 32, 32
      %1320 = vsyncadd [#allocation3], %s1319
      %s1322 = sshll.u32 [#allocation2], 4
      %s1323 = int_to_ptr.vmem [resolvable:$true] %s1322
      %1325 = dma.vmem_to_hbm [thread:$0]  %s1323, 32, %s5, [#allocation3]
    $region25: #{norm_short_net_forward.5} parent=1 // pred_fallthru
      _
    // Predicated region
    $region26: #{norm_short_net_forward.5} parent=1 // pred_check
      _
    $region27: #{norm_short_net_forward.5} parent=1 // pred_check_branch
      %1327 = sbr.rel (0) target = $region29
    $region28: #{norm_short_net_forward.5} parent=1 // pred_region
      %1328 = dma.done [#allocation3], 32
    $region29: #{norm_short_net_forward.5} parent=1 // pred_fallthru
      _
    %1329 = vsyncpa [#allocation3], 1

</llo_original>
